<compile_context>
chip_gen: v6e
topology: v6e:2x2x1
jax: 0.10.0
libtpu: 0.0.40
codegen_flags: <defaults>
</compile_context>

<pallas_src>
import math
import functools

import jax
import jax.numpy as jnp
from jax.experimental import pallas as pl
from jax.experimental.pallas import tpu as pltpu


# ------------------------------ tiling helper --------------------------------

def _pick_tile(dim, target):
    """Largest clean tile: `target` if it divides `dim`, else the full dim."""
    if dim <= target or dim % target != 0:
        return dim
    return target


# ------------------------------ Pallas kernels -------------------------------

def _proj_split_kernel(x_ref, w_ref, b_ref, *o_refs):
    # y = x @ [w0|w1|...] + b ; split columns into len(o_refs) equal outputs.
    y = jnp.dot(x_ref[...], w_ref[...], preferred_element_type=jnp.float32)
    y = y + b_ref[...]
    n = len(o_refs)
    d = y.shape[-1] // n
    for i, o_ref in enumerate(o_refs):
        o_ref[...] = y[:, i * d:(i + 1) * d].astype(o_ref.dtype)


def _attn_kernel(q_ref, k_ref, v_ref, bias_ref, o_ref, *, num_heads, scale):
    # One (batch, q-tile): all heads processed in-kernel, combined output is
    # written lane-dense as [tq, D].
    q = q_ref[0]              # (tq, D)
    k = k_ref[0]              # (Sk, D)
    v = v_ref[0]              # (Sk, D)
    bias = bias_ref[...]      # (tq, Sk) additive mask bias (0 / -1e9)
    D = q.shape[-1]
    dk = D // num_heads

    head_outs = []
    for h in range(num_heads):
        sl = slice(h * dk, (h + 1) * dk)
        qh = q[:, sl]
        kh = k[:, sl]
        vh = v[:, sl]
        # scores = qh @ kh^T via contracting-dim spec (no materialized transpose)
        s = jax.lax.dot_general(
            qh, kh,
            dimension_numbers=(((1,), (1,)), ((), ())),
            preferred_element_type=jnp.float32) * scale
        s = s + bias
        s = s - jnp.max(s, axis=-1, keepdims=True)
        p = jnp.exp(s)
        denom = jnp.sum(p, axis=-1, keepdims=True)
        p = p * pl.reciprocal(denom)   # EUP reciprocal (exact; approx=True if tol allows)
        head_outs.append(jnp.dot(p, vh, preferred_element_type=jnp.float32))

    o_ref[0] = jnp.concatenate(head_outs, axis=-1).astype(o_ref.dtype)


def _proj_add_ln_kernel(y_ref, w_ref, b_ref, r_ref, g_ref, bb_ref, o_ref, *, eps):
    # out = LayerNorm(residual + (y @ w + b))
    z = jnp.dot(y_ref[...], w_ref[...], preferred_element_type=jnp.float32)
    z = z + b_ref[...] + r_ref[...].astype(jnp.float32)
    mu = jnp.mean(z, axis=-1, keepdims=True)
    var = jnp.mean((z - mu) * (z - mu), axis=-1, keepdims=True)
    zn = (z - mu) * jax.lax.rsqrt(var + eps)
    o_ref[...] = (zn * g_ref[...] + bb_ref[...]).astype(o_ref.dtype)


def _ffn_add_ln_kernel(x_ref, w1_ref, b1_ref, w2_ref, b2_ref, g_ref, bb_ref,
                       o_ref, acc_ref, *, eps):
    # out = LayerNorm(x + (relu(x @ w1 + b1) @ w2 + b2)); d_ff tiled on axis 1.
    f = pl.program_id(1)

    @pl.when(f == 0)
    def _():
        acc_ref[...] = jnp.zeros_like(acc_ref)

    x = x_ref[...]
    h = jnp.dot(x, w1_ref[...], preferred_element_type=jnp.float32) + b1_ref[...]
    h = jnp.maximum(h, 0.0)
    acc_ref[...] += jnp.dot(h, w2_ref[...], preferred_element_type=jnp.float32)

    @pl.when(f == pl.num_programs(1) - 1)
    def _():
        z = acc_ref[...] + b2_ref[...] + x.astype(jnp.float32)
        mu = jnp.mean(z, axis=-1, keepdims=True)
        var = jnp.mean((z - mu) * (z - mu), axis=-1, keepdims=True)
        zn = (z - mu) * jax.lax.rsqrt(var + eps)
        o_ref[...] = (zn * g_ref[...] + bb_ref[...]).astype(o_ref.dtype)


# ----------------------------- pallas_call wrappers ---------------------------

def project_split(x2d, w, b, nsplit):
    """x2d: [M, Din], w: [Din, nsplit*Dout], b: [nsplit*Dout] -> nsplit x [M, Dout]."""
    M, Din = x2d.shape
    N = w.shape[1]
    Dout = N // nsplit
    tm = _pick_tile(M, 256)
    grid = (M // tm,)

    out_shape = tuple(jax.ShapeDtypeStruct((M, Dout), x2d.dtype) for _ in range(nsplit))
    out_specs = tuple(pl.BlockSpec((tm, Dout), lambda m: (m, 0)) for _ in range(nsplit))

    outs = pl.pallas_call(
        _proj_split_kernel,
        out_shape=out_shape,
        grid=grid,
        in_specs=[
            pl.BlockSpec((tm, Din), lambda m: (m, 0)),
            pl.BlockSpec((Din, N), lambda m: (0, 0)),
            pl.BlockSpec((1, N), lambda m: (0, 0)),
        ],
        out_specs=out_specs,
        compiler_params=pltpu.CompilerParams(dimension_semantics=("parallel",)),
    )(x2d, w, b.reshape(1, N))

    if not isinstance(outs, (tuple, list)):
        return (outs,)
    return tuple(outs)


def attention(q, k, v, bias, num_heads):
    """q: [B,Sq,D], k/v: [B,Sk,D], bias: [Sq,Sk] additive -> [B,Sq,D] (heads combined)."""
    B, Sq, D = q.shape
    Sk = k.shape[1]
    scale = 1.0 / math.sqrt(D // num_heads)
    tq = _pick_tile(Sq, 256)
    grid = (B, Sq // tq)

    return pl.pallas_call(
        functools.partial(_attn_kernel, num_heads=num_heads, scale=scale),
        out_shape=jax.ShapeDtypeStruct((B, Sq, D), q.dtype),
        grid=grid,
        in_specs=[
            pl.BlockSpec((1, tq, D), lambda b, i: (b, i, 0)),
            pl.BlockSpec((1, Sk, D), lambda b, i: (b, 0, 0)),
            pl.BlockSpec((1, Sk, D), lambda b, i: (b, 0, 0)),
            pl.BlockSpec((tq, Sk), lambda b, i: (i, 0)),
        ],
        out_specs=pl.BlockSpec((1, tq, D), lambda b, i: (b, i, 0)),
        compiler_params=pltpu.CompilerParams(
            dimension_semantics=("parallel", "parallel")),
    )(q, k, v, bias)


def proj_add_layernorm(y2d, w, b, resid2d, gamma, beta, eps=1e-5):
    """LayerNorm(resid + y2d @ w + b). y2d/resid2d: [M, D]."""
    M, D = y2d.shape
    Dout = w.shape[1]
    tm = _pick_tile(M, 256)
    grid = (M // tm,)

    return pl.pallas_call(
        functools.partial(_proj_add_ln_kernel, eps=eps),
        out_shape=jax.ShapeDtypeStruct((M, Dout), y2d.dtype),
        grid=grid,
        in_specs=[
            pl.BlockSpec((tm, D), lambda m: (m, 0)),
            pl.BlockSpec((D, Dout), lambda m: (0, 0)),
            pl.BlockSpec((1, Dout), lambda m: (0, 0)),
            pl.BlockSpec((tm, Dout), lambda m: (m, 0)),
            pl.BlockSpec((1, Dout), lambda m: (0, 0)),
            pl.BlockSpec((1, Dout), lambda m: (0, 0)),
        ],
        out_specs=pl.BlockSpec((tm, Dout), lambda m: (m, 0)),
        compiler_params=pltpu.CompilerParams(dimension_semantics=("parallel",)),
    )(y2d, w, b.reshape(1, Dout), resid2d, gamma.reshape(1, Dout), beta.reshape(1, Dout))


def ffn_add_layernorm(x2d, w1, b1, w2, b2, gamma, beta, eps=1e-5):
    """LayerNorm(x + relu(x @ w1 + b1) @ w2 + b2). x2d: [M, D]."""
    M, D = x2d.shape
    DFF = w1.shape[1]
    tm = _pick_tile(M, 256)
    tf = _pick_tile(DFF, 512)   # keeps per-step weight blocks small (v7x 64 MiB VMEM)
    grid = (M // tm, DFF // tf)

    return pl.pallas_call(
        functools.partial(_ffn_add_ln_kernel, eps=eps),
        out_shape=jax.ShapeDtypeStruct((M, D), x2d.dtype),
        grid=grid,
        in_specs=[
            pl.BlockSpec((tm, D), lambda m, f: (m, 0)),
            pl.BlockSpec((D, tf), lambda m, f: (0, f)),
            pl.BlockSpec((1, tf), lambda m, f: (0, f)),
            pl.BlockSpec((tf, D), lambda m, f: (f, 0)),
            pl.BlockSpec((1, D), lambda m, f: (0, 0)),
            pl.BlockSpec((1, D), lambda m, f: (0, 0)),
            pl.BlockSpec((1, D), lambda m, f: (0, 0)),
        ],
        out_specs=pl.BlockSpec((tm, D), lambda m, f: (m, 0)),
        scratch_shapes=[pltpu.VMEM((tm, D), jnp.float32)],
        compiler_params=pltpu.CompilerParams(
            dimension_semantics=("parallel", "arbitrary")),
    )(x2d, w1, b1.reshape(1, DFF), w2, b2.reshape(1, D),
      gamma.reshape(1, D), beta.reshape(1, D))


# ------------------------------ module wrappers -------------------------------

def self_attention_block(x, p, bias, gamma, beta, num_heads):
    B, S, D = x.shape
    x2d = x.reshape(B * S, D)
    q, k, v = project_split(x2d, p["w_qkv"], p["b_qkv"], 3)       # one fused matmul
    attn = attention(q.reshape(B, S, D), k.reshape(B, S, D), v.reshape(B, S, D),
                     bias, num_heads)
    out2d = proj_add_layernorm(attn.reshape(B * S, D), p["wo"], p["bo"],
                               x2d, gamma, beta)                  # W_o + residual + LN
    return out2d.reshape(B, S, D)


def cross_attention_block(x, enc, p, bias, gamma, beta, num_heads):
    B, Sq, D = x.shape
    Sk = enc.shape[1]
    x2d = x.reshape(B * Sq, D)
    (q,) = project_split(x2d, p["wq"], p["bq"], 1)
    k, v = project_split(enc.reshape(B * Sk, D), p["w_kv"], p["b_kv"], 2)  # fused K|V
    attn = attention(q.reshape(B, Sq, D), k.reshape(B, Sk, D), v.reshape(B, Sk, D),
                     bias, num_heads)
    out2d = proj_add_layernorm(attn.reshape(B * Sq, D), p["wo"], p["bo"],
                               x2d, gamma, beta)
    return out2d.reshape(B, Sq, D)


def decoder_layer(x, enc_output, src_mask, tgt_mask, params, num_heads):
    # Masks (1 = keep, 0 = mask) -> additive f32 bias, computed once per call.
    src_bias = jnp.where(src_mask == 0, -1e9, 0.0).astype(jnp.float32)
    tgt_bias = jnp.where(tgt_mask == 0, -1e9, 0.0).astype(jnp.float32)

    # self-attention + residual + LN (dropout is identity in eval mode)
    x = self_attention_block(x, params["self_attn"], tgt_bias,
                             params["ln1_g"], params["ln1_b"], num_heads)
    # cross-attention + residual + LN
    x = cross_attention_block(x, enc_output, params["cross_attn"], src_bias,
                              params["ln2_g"], params["ln2_b"], num_heads)
    # feed-forward + residual + LN (single fused kernel)
    B, S, D = x.shape
    out2d = ffn_add_layernorm(x.reshape(B * S, D),
                              params["ffn"]["w1"], params["ffn"]["b1"],
                              params["ffn"]["w2"], params["ffn"]["b2"],
                              params["ln3_g"], params["ln3_b"])
    return out2d.reshape(B, S, D)


def pack_params(params):
    """Pre-concatenate fused projection weights (done once, outside kernels)."""
    def pack_attn(p):
        return {
            "w_qkv": jnp.concatenate([p["wq"], p["wk"], p["wv"]], axis=1),
            "b_qkv": jnp.concatenate([p["bq"], p["bk"], p["bv"]], axis=0),
            "wq": p["wq"], "bq": p["bq"],
            "w_kv": jnp.concatenate([p["wk"], p["wv"]], axis=1),
            "b_kv": jnp.concatenate([p["bk"], p["bv"]], axis=0),
            "wo": p["wo"], "bo": p["bo"],
        }
    packed = dict(params)
    packed["self_attn"] = pack_attn(params["self_attn"])
    packed["cross_attn"] = pack_attn(params["cross_attn"])
    return packed


# ------------------------------ reference (pure JAX) --------------------------

def _ref_mha(x_q, x_kv, p, mask, num_heads):
    B, Sq, D = x_q.shape
    Sk = x_kv.shape[1]
    dk = D // num_heads
    q = (x_q @ p["wq"] + p["bq"]).reshape(B, Sq, num_heads, dk).transpose(0, 2, 1, 3)
    k = (x_kv @ p["wk"] + p["bk"]).reshape(B, Sk, num_heads, dk).transpose(0, 2, 1, 3)
    v = (x_kv @ p["wv"] + p["bv"]).reshape(B, Sk, num_heads, dk).transpose(0, 2, 1, 3)
    s = jnp.einsum("bhqd,bhkd->bhqk", q, k) / math.sqrt(dk)
    s = jnp.where(mask == 0, -1e9, s)
    a = jax.nn.softmax(s, axis=-1)
    o = jnp.einsum("bhqk,bhkd->bhqd", a, v).transpose(0, 2, 1, 3).reshape(B, Sq, D)
    return o @ p["wo"] + p["bo"]


def _ref_ln(z, g, b, eps=1e-5):
    mu = jnp.mean(z, axis=-1, keepdims=True)
    var = jnp.mean((z - mu) ** 2, axis=-1, keepdims=True)
    return (z - mu) / jnp.sqrt(var + eps) * g + b


def _ref_decoder_layer(x, enc, src_mask, tgt_mask, params, num_heads):
    a = _ref_mha(x, x, params["self_attn"], tgt_mask, num_heads)
    x = _ref_ln(x + a, params["ln1_g"], params["ln1_b"])
    a = _ref_mha(x, enc, params["cross_attn"], src_mask, num_heads)
    x = _ref_ln(x + a, params["ln2_g"], params["ln2_b"])
    h = jnp.maximum(x @ params["ffn"]["w1"] + params["ffn"]["b1"], 0.0)
    f = h @ params["ffn"]["w2"] + params["ffn"]["b2"]
    x = _ref_ln(x + f, params["ln3_g"], params["ln3_b"])
    return x


# ----------------------------------- main -------------------------------------

def _init_params(key, d_model, d_ff):
    keys = jax.random.split(key, 16)

    def lin(k, din, dout, scale=0.05):
        kw, kb = jax.random.split(k)
        return (jax.random.normal(kw, (din, dout), jnp.float32) * scale,
                jax.random.normal(kb, (dout,), jnp.float32) * scale)

    def attn_params(ks):
        wq, bq = lin(ks[0], d_model, d_model)
        wk, bk = lin(ks[1], d_model, d_model)
        wv, bv = lin(ks[2], d_model, d_model)
        wo, bo = lin(ks[3], d_model, d_model)
        return {"wq": wq, "bq": bq, "wk": wk, "bk": bk,
                "wv": wv, "bv": bv, "wo": wo, "bo": bo}

    w1, b1 = lin(keys[8], d_model, d_ff)
    w2, b2 = lin(keys[9], d_ff, d_model)
    return {
        "self_attn": attn_params(keys[0:4]),
        "cross_attn": attn_params(keys[4:8]),
        "ffn": {"w1": w1, "b1": b1, "w2": w2, "b2": b2},
        "ln1_g": jnp.ones((d_model,), jnp.float32),
        "ln1_b": jnp.zeros((d_model,), jnp.float32),
        "ln2_g": jnp.ones((d_model,), jnp.float32),
        "ln2_b": jnp.zeros((d_model,), jnp.float32),
        "ln3_g": jnp.ones((d_model,), jnp.float32),
        "ln3_b": jnp.zeros((d_model,), jnp.float32),
    }


if __name__ == "__main__":
    B, S, D, H, DFF = 2, 8, 64, 4, 128

    key = jax.random.PRNGKey(0)
    kx, ke, kp = jax.random.split(key, 3)
    x = jax.random.normal(kx, (B, S, D), jnp.float32)
    enc_output = jax.random.normal(ke, (B, S, D), jnp.float32)
    params = _init_params(kp, D, DFF)
    packed = pack_params(params)

    # tgt_mask: causal; src_mask: all ones (no masking). 1 = keep, 0 = mask.
    tgt_mask = jnp.tril(jnp.ones((S, S), jnp.float32))
    src_mask = jnp.ones((S, S), jnp.float32)

    decoder_fn = jax.jit(decoder_layer, static_argnums=(5,))
    out = decoder_fn(x, enc_output, src_mask, tgt_mask, packed, H)
    out = jax.block_until_ready(out)

    ref = _ref_decoder_layer(x, enc_output, src_mask, tgt_mask, params, H)
    assert out.shape == (B, S, D)
    err = jnp.max(jnp.abs(out - ref))
    assert jnp.allclose(out, ref, atol=1e-4, rtol=1e-4), f"max abs err = {err}"

    print("KERNEL_OK")
</pallas_src>

<mosaic_0001>
module attributes {stable_mosaic.version = 11 : i64} {
  func.func @_proj_split_kernel(%arg0: i32, %arg1: memref<16x64xf32, #tpu.memory_space<vmem>>, %arg2: memref<64x128xf32, #tpu.memory_space<vmem>>, %arg3: memref<1x128xf32, #tpu.memory_space<vmem>>, %arg4: memref<16x64xf32, #tpu.memory_space<vmem>>, %arg5: memref<16x64xf32, #tpu.memory_space<vmem>>) attributes {dimension_semantics = [#tpu.dimension_semantics<parallel>], iteration_bounds = array<i64: 1>, scalar_prefetch = 0 : i64, scratch_operands = 0 : i64, tpu.core_type = #tpu.core_type<tc>, window_params = [{transform_indices = @transform_0, window_bounds = array<i64: 16, 64>}, {pipeline_mode = #tpu.pipeline_mode<synchronous>, transform_indices = @transform_1, window_bounds = array<i64: 64, 128>}, {pipeline_mode = #tpu.pipeline_mode<synchronous>, transform_indices = @transform_2, window_bounds = array<i64: 1, 128>}, {transform_indices = @transform_3, window_bounds = array<i64: 16, 64>}, {transform_indices = @transform_4, window_bounds = array<i64: 16, 64>}]} {
    %c0 = arith.constant 0 : index
    %c0_0 = arith.constant 0 : index
    %0 = vector.load %arg1[%c0, %c0_0] : memref<16x64xf32, #tpu.memory_space<vmem>>, vector<16x64xf32>
    %c0_1 = arith.constant 0 : index
    %c0_2 = arith.constant 0 : index
    %1 = vector.load %arg2[%c0_1, %c0_2] : memref<64x128xf32, #tpu.memory_space<vmem>>, vector<64x128xf32>
    %cst = arith.constant dense<0.000000e+00> : vector<16x128xf32>
    %2 = tpu.matmul %0, %1, %cst {dimension_numbers = #tpu.dot_dimension_numbers<[1], [0], [0], [1], [0, 0, 1, 1], [], []>} : vector<16x64xf32>, vector<64x128xf32>, vector<16x128xf32> -> vector<16x128xf32>
    %c0_3 = arith.constant 0 : index
    %c0_4 = arith.constant 0 : index
    %3 = vector.load %arg3[%c0_3, %c0_4] : memref<1x128xf32, #tpu.memory_space<vmem>>, vector<1x128xf32>
    %4 = vector.broadcast %3 : vector<1x128xf32> to vector<16x128xf32>
    %5 = arith.addf %2, %4 : vector<16x128xf32>
    %6 = vector.extract_strided_slice %5 {offsets = [0, 0], sizes = [16, 64], strides = [1, 1]} : vector<16x128xf32> to vector<16x64xf32>
    %c0_5 = arith.constant 0 : index
    %c0_6 = arith.constant 0 : index
    %7 = vector.load %arg4[%c0_5, %c0_6] : memref<16x64xf32, #tpu.memory_space<vmem>>, vector<16x64xf32>
    tpu.vector_store %arg4[%c0_5, %c0_6], %6 {strides = array<i32>} : memref<16x64xf32, #tpu.memory_space<vmem>>, vector<16x64xf32>,
    %8 = vector.extract_strided_slice %5 {offsets = [0, 64], sizes = [16, 64], strides = [1, 1]} : vector<16x128xf32> to vector<16x64xf32>
    %c0_7 = arith.constant 0 : index
    %c0_8 = arith.constant 0 : index
    %9 = vector.load %arg5[%c0_7, %c0_8] : memref<16x64xf32, #tpu.memory_space<vmem>>, vector<16x64xf32>
    tpu.vector_store %arg5[%c0_7, %c0_8], %8 {strides = array<i32>} : memref<16x64xf32, #tpu.memory_space<vmem>>, vector<16x64xf32>,
    return
  }
  func.func @transform_0(%arg0: i32) -> (i32, i32) {
    %c0_i32 = arith.constant 0 : i32
    %c0_i32_0 = arith.constant 0 : i32
    return %arg0, %c0_i32 : i32, i32
  }
  func.func @transform_1(%arg0: i32) -> (i32, i32) {
    %c0_i32 = arith.constant 0 : i32
    %c0_i32_0 = arith.constant 0 : i32
    %c0_i32_1 = arith.constant 0 : i32
    return %c0_i32, %c0_i32_0 : i32, i32
  }
  func.func @transform_2(%arg0: i32) -> (i32, i32) {
    %c0_i32 = arith.constant 0 : i32
    %c0_i32_0 = arith.constant 0 : i32
    %c0_i32_1 = arith.constant 0 : i32
    return %c0_i32, %c0_i32_0 : i32, i32
  }
  func.func @transform_3(%arg0: i32) -> (i32, i32) {
    %c0_i32 = arith.constant 0 : i32
    %c0_i32_0 = arith.constant 0 : i32
    return %arg0, %c0_i32 : i32, i32
  }
  func.func @transform_4(%arg0: i32) -> (i32, i32) {
    %c0_i32 = arith.constant 0 : i32
    %c0_i32_0 = arith.constant 0 : i32
    return %arg0, %c0_i32 : i32, i32
  }
}

module attributes {stable_mosaic.version = 11 : i64} {
  func.func @_attn_kernel(%arg0: i32, %arg1: i32, %arg2: memref<1x8x64xf32, #tpu.memory_space<vmem>>, %arg3: memref<1x8x64xf32, #tpu.memory_space<vmem>>, %arg4: memref<1x8x64xf32, #tpu.memory_space<vmem>>, %arg5: memref<8x8xf32, #tpu.memory_space<vmem>>, %arg6: memref<1x8x64xf32, #tpu.memory_space<vmem>>) attributes {dimension_semantics = [#tpu.dimension_semantics<parallel>, #tpu.dimension_semantics<parallel>], iteration_bounds = array<i64: 2, 1>, scalar_prefetch = 0 : i64, scratch_operands = 0 : i64, tpu.core_type = #tpu.core_type<tc>, window_params = [{transform_indices = @transform_0, window_bounds = array<i64: 1, 8, 64>}, {transform_indices = @transform_1, window_bounds = array<i64: 1, 8, 64>}, {transform_indices = @transform_2, window_bounds = array<i64: 1, 8, 64>}, {transform_indices = @transform_3, window_bounds = array<i64: 8, 8>}, {transform_indices = @transform_4, window_bounds = array<i64: 1, 8, 64>}]} {
    %c0 = arith.constant 0 : index
    %c0_0 = arith.constant 0 : index
    %c0_1 = arith.constant 0 : index
    %0 = vector.load %arg2[%c0, %c0_0, %c0_1] : memref<1x8x64xf32, #tpu.memory_space<vmem>>, vector<1x8x64xf32>
    %1 = vector.shape_cast %0 : vector<1x8x64xf32> to vector<8x64xf32>
    %c0_2 = arith.constant 0 : index
    %c0_3 = arith.constant 0 : index
    %c0_4 = arith.constant 0 : index
    %2 = vector.load %arg3[%c0_2, %c0_3, %c0_4] : memref<1x8x64xf32, #tpu.memory_space<vmem>>, vector<1x8x64xf32>
    %3 = vector.shape_cast %2 : vector<1x8x64xf32> to vector<8x64xf32>
    %c0_5 = arith.constant 0 : index
    %c0_6 = arith.constant 0 : index
    %c0_7 = arith.constant 0 : index
    %4 = vector.load %arg4[%c0_5, %c0_6, %c0_7] : memref<1x8x64xf32, #tpu.memory_space<vmem>>, vector<1x8x64xf32>
    %5 = vector.shape_cast %4 : vector<1x8x64xf32> to vector<8x64xf32>
    %c0_8 = arith.constant 0 : index
    %c0_9 = arith.constant 0 : index
    %6 = vector.load %arg5[%c0_8, %c0_9] : memref<8x8xf32, #tpu.memory_space<vmem>>, vector<8x8xf32>
    %7 = vector.extract_strided_slice %1 {offsets = [0, 0], sizes = [8, 16], strides = [1, 1]} : vector<8x64xf32> to vector<8x16xf32>
    %8 = vector.extract_strided_slice %3 {offsets = [0, 0], sizes = [8, 16], strides = [1, 1]} : vector<8x64xf32> to vector<8x16xf32>
    %9 = vector.extract_strided_slice %5 {offsets = [0, 0], sizes = [8, 16], strides = [1, 1]} : vector<8x64xf32> to vector<8x16xf32>
    %cst = arith.constant dense<0.000000e+00> : vector<8x8xf32>
    %10 = tpu.matmul %7, %8, %cst {dimension_numbers = #tpu.dot_dimension_numbers<[1], [1], [0], [0], [0, 0, 1, 0], [], []>} : vector<8x16xf32>, vector<8x16xf32>, vector<8x8xf32> -> vector<8x8xf32>
    %cst_10 = arith.constant 2.500000e-01 : f32
    %11 = vector.broadcast %cst_10 : f32 to vector<8x8xf32>
    %12 = arith.mulf %10, %11 : vector<8x8xf32>
    %13 = arith.addf %12, %6 : vector<8x8xf32>
    %cst_11 = arith.constant dense<0xFF800000> : vector<8xf32>
    %14 = vector.multi_reduction <maximumf>, %13, %cst_11 [1] : vector<8x8xf32> to vector<8xf32>
    %15 = vector.shape_cast %14 : vector<8xf32> to vector<8x1xf32>
    %16 = vector.broadcast %15 : vector<8x1xf32> to vector<8x8xf32>
    %17 = arith.subf %13, %16 : vector<8x8xf32>
    %18 = math.exp %17 : vector<8x8xf32>
    %cst_12 = arith.constant dense<0.000000e+00> : vector<8xf32>
    %19 = vector.multi_reduction <add>, %18, %cst_12 [1] : vector<8x8xf32> to vector<8xf32>
    %20 = vector.shape_cast %19 : vector<8xf32> to vector<8x1xf32>
    %21 = tpu.reciprocal %20 : vector<8x1xf32> -> vector<8x1xf32>
    %22 = vector.broadcast %21 : vector<8x1xf32> to vector<8x8xf32>
    %23 = arith.mulf %18, %22 : vector<8x8xf32>
    %cst_13 = arith.constant dense<0.000000e+00> : vector<8x16xf32>
    %24 = tpu.matmul %23, %9, %cst_13 {dimension_numbers = #tpu.dot_dimension_numbers<[1], [0], [0], [1], [0, 0, 1, 1], [], []>} : vector<8x8xf32>, vector<8x16xf32>, vector<8x16xf32> -> vector<8x16xf32>
    %25 = vector.extract_strided_slice %1 {offsets = [0, 16], sizes = [8, 16], strides = [1, 1]} : vector<8x64xf32> to vector<8x16xf32>
    %26 = vector.extract_strided_slice %3 {offsets = [0, 16], sizes = [8, 16], strides = [1, 1]} : vector<8x64xf32> to vector<8x16xf32>
    %27 = vector.extract_strided_slice %5 {offsets = [0, 16], sizes = [8, 16], strides = [1, 1]} : vector<8x64xf32> to vector<8x16xf32>
    %cst_14 = arith.constant dense<0.000000e+00> : vector<8x8xf32>
    %28 = tpu.matmul %25, %26, %cst_14 {dimension_numbers = #tpu.dot_dimension_numbers<[1], [1], [0], [0], [0, 0, 1, 0], [], []>} : vector<8x16xf32>, vector<8x16xf32>, vector<8x8xf32> -> vector<8x8xf32>
    %cst_15 = arith.constant 2.500000e-01 : f32
    %29 = vector.broadcast %cst_15 : f32 to vector<8x8xf32>
    %30 = arith.mulf %28, %29 : vector<8x8xf32>
    %31 = arith.addf %30, %6 : vector<8x8xf32>
    %cst_16 = arith.constant dense<0xFF800000> : vector<8xf32>
    %32 = vector.multi_reduction <maximumf>, %31, %cst_16 [1] : vector<8x8xf32> to vector<8xf32>
    %33 = vector.shape_cast %32 : vector<8xf32> to vector<8x1xf32>
    %34 = vector.broadcast %33 : vector<8x1xf32> to vector<8x8xf32>
    %35 = arith.subf %31, %34 : vector<8x8xf32>
    %36 = math.exp %35 : vector<8x8xf32>
    %cst_17 = arith.constant dense<0.000000e+00> : vector<8xf32>
    %37 = vector.multi_reduction <add>, %36, %cst_17 [1] : vector<8x8xf32> to vector<8xf32>
    %38 = vector.shape_cast %37 : vector<8xf32> to vector<8x1xf32>
    %39 = tpu.reciprocal %38 : vector<8x1xf32> -> vector<8x1xf32>
    %40 = vector.broadcast %39 : vector<8x1xf32> to vector<8x8xf32>
    %41 = arith.mulf %36, %40 : vector<8x8xf32>
    %cst_18 = arith.constant dense<0.000000e+00> : vector<8x16xf32>
    %42 = tpu.matmul %41, %27, %cst_18 {dimension_numbers = #tpu.dot_dimension_numbers<[1], [0], [0], [1], [0, 0, 1, 1], [], []>} : vector<8x8xf32>, vector<8x16xf32>, vector<8x16xf32> -> vector<8x16xf32>
    %43 = vector.extract_strided_slice %1 {offsets = [0, 32], sizes = [8, 16], strides = [1, 1]} : vector<8x64xf32> to vector<8x16xf32>
    %44 = vector.extract_strided_slice %3 {offsets = [0, 32], sizes = [8, 16], strides = [1, 1]} : vector<8x64xf32> to vector<8x16xf32>
    %45 = vector.extract_strided_slice %5 {offsets = [0, 32], sizes = [8, 16], strides = [1, 1]} : vector<8x64xf32> to vector<8x16xf32>
    %cst_19 = arith.constant dense<0.000000e+00> : vector<8x8xf32>
    %46 = tpu.matmul %43, %44, %cst_19 {dimension_numbers = #tpu.dot_dimension_numbers<[1], [1], [0], [0], [0, 0, 1, 0], [], []>} : vector<8x16xf32>, vector<8x16xf32>, vector<8x8xf32> -> vector<8x8xf32>
    %cst_20 = arith.constant 2.500000e-01 : f32
    %47 = vector.broadcast %cst_20 : f32 to vector<8x8xf32>
    %48 = arith.mulf %46, %47 : vector<8x8xf32>
    %49 = arith.addf %48, %6 : vector<8x8xf32>
    %cst_21 = arith.constant dense<0xFF800000> : vector<8xf32>
    %50 = vector.multi_reduction <maximumf>, %49, %cst_21 [1] : vector<8x8xf32> to vector<8xf32>
    %51 = vector.shape_cast %50 : vector<8xf32> to vector<8x1xf32>
    %52 = vector.broadcast %51 : vector<8x1xf32> to vector<8x8xf32>
    %53 = arith.subf %49, %52 : vector<8x8xf32>
    %54 = math.exp %53 : vector<8x8xf32>
    %cst_22 = arith.constant dense<0.000000e+00> : vector<8xf32>
    %55 = vector.multi_reduction <add>, %54, %cst_22 [1] : vector<8x8xf32> to vector<8xf32>
    %56 = vector.shape_cast %55 : vector<8xf32> to vector<8x1xf32>
    %57 = tpu.reciprocal %56 : vector<8x1xf32> -> vector<8x1xf32>
    %58 = vector.broadcast %57 : vector<8x1xf32> to vector<8x8xf32>
    %59 = arith.mulf %54, %58 : vector<8x8xf32>
    %cst_23 = arith.constant dense<0.000000e+00> : vector<8x16xf32>
    %60 = tpu.matmul %59, %45, %cst_23 {dimension_numbers = #tpu.dot_dimension_numbers<[1], [0], [0], [1], [0, 0, 1, 1], [], []>} : vector<8x8xf32>, vector<8x16xf32>, vector<8x16xf32> -> vector<8x16xf32>
    %61 = vector.extract_strided_slice %1 {offsets = [0, 48], sizes = [8, 16], strides = [1, 1]} : vector<8x64xf32> to vector<8x16xf32>
    %62 = vector.extract_strided_slice %3 {offsets = [0, 48], sizes = [8, 16], strides = [1, 1]} : vector<8x64xf32> to vector<8x16xf32>
    %63 = vector.extract_strided_slice %5 {offsets = [0, 48], sizes = [8, 16], strides = [1, 1]} : vector<8x64xf32> to vector<8x16xf32>
    %cst_24 = arith.constant dense<0.000000e+00> : vector<8x8xf32>
    %64 = tpu.matmul %61, %62, %cst_24 {dimension_numbers = #tpu.dot_dimension_numbers<[1], [1], [0], [0], [0, 0, 1, 0], [], []>} : vector<8x16xf32>, vector<8x16xf32>, vector<8x8xf32> -> vector<8x8xf32>
    %cst_25 = arith.constant 2.500000e-01 : f32
    %65 = vector.broadcast %cst_25 : f32 to vector<8x8xf32>
    %66 = arith.mulf %64, %65 : vector<8x8xf32>
    %67 = arith.addf %66, %6 : vector<8x8xf32>
    %cst_26 = arith.constant dense<0xFF800000> : vector<8xf32>
    %68 = vector.multi_reduction <maximumf>, %67, %cst_26 [1] : vector<8x8xf32> to vector<8xf32>
    %69 = vector.shape_cast %68 : vector<8xf32> to vector<8x1xf32>
    %70 = vector.broadcast %69 : vector<8x1xf32> to vector<8x8xf32>
    %71 = arith.subf %67, %70 : vector<8x8xf32>
    %72 = math.exp %71 : vector<8x8xf32>
    %cst_27 = arith.constant dense<0.000000e+00> : vector<8xf32>
    %73 = vector.multi_reduction <add>, %72, %cst_27 [1] : vector<8x8xf32> to vector<8xf32>
    %74 = vector.shape_cast %73 : vector<8xf32> to vector<8x1xf32>
    %75 = tpu.reciprocal %74 : vector<8x1xf32> -> vector<8x1xf32>
    %76 = vector.broadcast %75 : vector<8x1xf32> to vector<8x8xf32>
    %77 = arith.mulf %72, %76 : vector<8x8xf32>
    %cst_28 = arith.constant dense<0.000000e+00> : vector<8x16xf32>
    %78 = tpu.matmul %77, %63, %cst_28 {dimension_numbers = #tpu.dot_dimension_numbers<[1], [0], [0], [1], [0, 0, 1, 1], [], []>} : vector<8x8xf32>, vector<8x16xf32>, vector<8x16xf32> -> vector<8x16xf32>
    %79 = tpu.concatenate %24, %42, %60, %78 in 1 : vector<8x16xf32>, vector<8x16xf32>, vector<8x16xf32>, vector<8x16xf32> -> vector<8x64xf32>
    %c0_29 = arith.constant 0 : index
    %c0_30 = arith.constant 0 : index
    %c0_31 = arith.constant 0 : index
    %80 = vector.load %arg6[%c0_29, %c0_30, %c0_31] : memref<1x8x64xf32, #tpu.memory_space<vmem>>, vector<1x8x64xf32>
    %81 = vector.shape_cast %80 : vector<1x8x64xf32> to vector<8x64xf32>
    %82 = vector.shape_cast %79 : vector<8x64xf32> to vector<1x8x64xf32>
    tpu.vector_store %arg6[%c0_29, %c0_30, %c0_31], %82 {strides = array<i32>} : memref<1x8x64xf32, #tpu.memory_space<vmem>>, vector<1x8x64xf32>,
    return
  }
  func.func @transform_0(%arg0: i32, %arg1: i32) -> (i32, i32, i32) {
    %c0_i32 = arith.constant 0 : i32
    %c0_i32_0 = arith.constant 0 : i32
    return %arg0, %arg1, %c0_i32 : i32, i32, i32
  }
  func.func @transform_1(%arg0: i32, %arg1: i32) -> (i32, i32, i32) {
    %c0_i32 = arith.constant 0 : i32
    %c0_i32_0 = arith.constant 0 : i32
    %c0_i32_1 = arith.constant 0 : i32
    return %arg0, %c0_i32, %c0_i32_0 : i32, i32, i32
  }
  func.func @transform_2(%arg0: i32, %arg1: i32) -> (i32, i32, i32) {
    %c0_i32 = arith.constant 0 : i32
    %c0_i32_0 = arith.constant 0 : i32
    %c0_i32_1 = arith.constant 0 : i32
    return %arg0, %c0_i32, %c0_i32_0 : i32, i32, i32
  }
  func.func @transform_3(%arg0: i32, %arg1: i32) -> (i32, i32) {
    %c0_i32 = arith.constant 0 : i32
    %c0_i32_0 = arith.constant 0 : i32
    return %arg1, %c0_i32 : i32, i32
  }
  func.func @transform_4(%arg0: i32, %arg1: i32) -> (i32, i32, i32) {
    %c0_i32 = arith.constant 0 : i32
    %c0_i32_0 = arith.constant 0 : i32
    return %arg0, %arg1, %c0_i32 : i32, i32, i32
  }
}

module attributes {stable_mosaic.version = 11 : i64} {
  func.func @_proj_split_kernel(%arg0: i32, %arg1: memref<16x64xf32, #tpu.memory_space<vmem>>, %arg2: memref<64x192xf32, #tpu.memory_space<vmem>>, %arg3: memref<1x192xf32, #tpu.memory_space<vmem>>, %arg4: memref<16x64xf32, #tpu.memory_space<vmem>>, %arg5: memref<16x64xf32, #tpu.memory_space<vmem>>, %arg6: memref<16x64xf32, #tpu.memory_space<vmem>>) attributes {dimension_semantics = [#tpu.dimension_semantics<parallel>], iteration_bounds = array<i64: 1>, scalar_prefetch = 0 : i64, scratch_operands = 0 : i64, tpu.core_type = #tpu.core_type<tc>, window_params = [{transform_indices = @transform_0, window_bounds = array<i64: 16, 64>}, {pipeline_mode = #tpu.pipeline_mode<synchronous>, transform_indices = @transform_1, window_bounds = array<i64: 64, 192>}, {pipeline_mode = #tpu.pipeline_mode<synchronous>, transform_indices = @transform_2, window_bounds = array<i64: 1, 192>}, {transform_indices = @transform_3, window_bounds = array<i64: 16, 64>}, {transform_indices = @transform_4, window_bounds = array<i64: 16, 64>}, {transform_indices = @transform_5, window_bounds = array<i64: 16, 64>}]} {
    %c0 = arith.constant 0 : index
    %c0_0 = arith.constant 0 : index
    %0 = vector.load %arg1[%c0, %c0_0] : memref<16x64xf32, #tpu.memory_space<vmem>>, vector<16x64xf32>
    %c0_1 = arith.constant 0 : index
    %c0_2 = arith.constant 0 : index
    %1 = vector.load %arg2[%c0_1, %c0_2] : memref<64x192xf32, #tpu.memory_space<vmem>>, vector<64x192xf32>
    %cst = arith.constant dense<0.000000e+00> : vector<16x192xf32>
    %2 = tpu.matmul %0, %1, %cst {dimension_numbers = #tpu.dot_dimension_numbers<[1], [0], [0], [1], [0, 0, 1, 1], [], []>} : vector<16x64xf32>, vector<64x192xf32>, vector<16x192xf32> -> vector<16x192xf32>
    %c0_3 = arith.constant 0 : index
    %c0_4 = arith.constant 0 : index
    %3 = vector.load %arg3[%c0_3, %c0_4] : memref<1x192xf32, #tpu.memory_space<vmem>>, vector<1x192xf32>
    %4 = vector.broadcast %3 : vector<1x192xf32> to vector<16x192xf32>
    %5 = arith.addf %2, %4 : vector<16x192xf32>
    %6 = vector.extract_strided_slice %5 {offsets = [0, 0], sizes = [16, 64], strides = [1, 1]} : vector<16x192xf32> to vector<16x64xf32>
    %c0_5 = arith.constant 0 : index
    %c0_6 = arith.constant 0 : index
    %7 = vector.load %arg4[%c0_5, %c0_6] : memref<16x64xf32, #tpu.memory_space<vmem>>, vector<16x64xf32>
    tpu.vector_store %arg4[%c0_5, %c0_6], %6 {strides = array<i32>} : memref<16x64xf32, #tpu.memory_space<vmem>>, vector<16x64xf32>,
    %8 = vector.extract_strided_slice %5 {offsets = [0, 64], sizes = [16, 64], strides = [1, 1]} : vector<16x192xf32> to vector<16x64xf32>
    %c0_7 = arith.constant 0 : index
    %c0_8 = arith.constant 0 : index
    %9 = vector.load %arg5[%c0_7, %c0_8] : memref<16x64xf32, #tpu.memory_space<vmem>>, vector<16x64xf32>
    tpu.vector_store %arg5[%c0_7, %c0_8], %8 {strides = array<i32>} : memref<16x64xf32, #tpu.memory_space<vmem>>, vector<16x64xf32>,
    %10 = vector.extract_strided_slice %5 {offsets = [0, 128], sizes = [16, 64], strides = [1, 1]} : vector<16x192xf32> to vector<16x64xf32>
    %c0_9 = arith.constant 0 : index
    %c0_10 = arith.constant 0 : index
    %11 = vector.load %arg6[%c0_9, %c0_10] : memref<16x64xf32, #tpu.memory_space<vmem>>, vector<16x64xf32>
    tpu.vector_store %arg6[%c0_9, %c0_10], %10 {strides = array<i32>} : memref<16x64xf32, #tpu.memory_space<vmem>>, vector<16x64xf32>,
    return
  }
  func.func @transform_0(%arg0: i32) -> (i32, i32) {
    %c0_i32 = arith.constant 0 : i32
    %c0_i32_0 = arith.constant 0 : i32
    return %arg0, %c0_i32 : i32, i32
  }
  func.func @transform_1(%arg0: i32) -> (i32, i32) {
    %c0_i32 = arith.constant 0 : i32
    %c0_i32_0 = arith.constant 0 : i32
    %c0_i32_1 = arith.constant 0 : i32
    return %c0_i32, %c0_i32_0 : i32, i32
  }
  func.func @transform_2(%arg0: i32) -> (i32, i32) {
    %c0_i32 = arith.constant 0 : i32
    %c0_i32_0 = arith.constant 0 : i32
    %c0_i32_1 = arith.constant 0 : i32
    return %c0_i32, %c0_i32_0 : i32, i32
  }
  func.func @transform_3(%arg0: i32) -> (i32, i32) {
    %c0_i32 = arith.constant 0 : i32
    %c0_i32_0 = arith.constant 0 : i32
    return %arg0, %c0_i32 : i32, i32
  }
  func.func @transform_4(%arg0: i32) -> (i32, i32) {
    %c0_i32 = arith.constant 0 : i32
    %c0_i32_0 = arith.constant 0 : i32
    return %arg0, %c0_i32 : i32, i32
  }
  func.func @transform_5(%arg0: i32) -> (i32, i32) {
    %c0_i32 = arith.constant 0 : i32
    %c0_i32_0 = arith.constant 0 : i32
    return %arg0, %c0_i32 : i32, i32
  }
}

module attributes {stable_mosaic.version = 11 : i64} {
  func.func @_proj_add_ln_kernel(%arg0: i32, %arg1: memref<16x64xf32, #tpu.memory_space<vmem>>, %arg2: memref<64x64xf32, #tpu.memory_space<vmem>>, %arg3: memref<1x64xf32, #tpu.memory_space<vmem>>, %arg4: memref<16x64xf32, #tpu.memory_space<vmem>>, %arg5: memref<1x64xf32, #tpu.memory_space<vmem>>, %arg6: memref<1x64xf32, #tpu.memory_space<vmem>>, %arg7: memref<16x64xf32, #tpu.memory_space<vmem>>) attributes {dimension_semantics = [#tpu.dimension_semantics<parallel>], iteration_bounds = array<i64: 1>, scalar_prefetch = 0 : i64, scratch_operands = 0 : i64, tpu.core_type = #tpu.core_type<tc>, window_params = [{transform_indices = @transform_0, window_bounds = array<i64: 16, 64>}, {pipeline_mode = #tpu.pipeline_mode<synchronous>, transform_indices = @transform_1, window_bounds = array<i64: 64, 64>}, {pipeline_mode = #tpu.pipeline_mode<synchronous>, transform_indices = @transform_2, window_bounds = array<i64: 1, 64>}, {transform_indices = @transform_3, window_bounds = array<i64: 16, 64>}, {pipeline_mode = #tpu.pipeline_mode<synchronous>, transform_indices = @transform_4, window_bounds = array<i64: 1, 64>}, {pipeline_mode = #tpu.pipeline_mode<synchronous>, transform_indices = @transform_5, window_bounds = array<i64: 1, 64>}, {transform_indices = @transform_6, window_bounds = array<i64: 16, 64>}]} {
    %c0 = arith.constant 0 : index
    %c0_0 = arith.constant 0 : index
    %0 = vector.load %arg1[%c0, %c0_0] : memref<16x64xf32, #tpu.memory_space<vmem>>, vector<16x64xf32>
    %c0_1 = arith.constant 0 : index
    %c0_2 = arith.constant 0 : index
    %1 = vector.load %arg2[%c0_1, %c0_2] : memref<64x64xf32, #tpu.memory_space<vmem>>, vector<64x64xf32>
    %cst = arith.constant dense<0.000000e+00> : vector<16x64xf32>
    %2 = tpu.matmul %0, %1, %cst {dimension_numbers = #tpu.dot_dimension_numbers<[1], [0], [0], [1], [0, 0, 1, 1], [], []>} : vector<16x64xf32>, vector<64x64xf32>, vector<16x64xf32> -> vector<16x64xf32>
    %c0_3 = arith.constant 0 : index
    %c0_4 = arith.constant 0 : index
    %3 = vector.load %arg3[%c0_3, %c0_4] : memref<1x64xf32, #tpu.memory_space<vmem>>, vector<1x64xf32>
    %4 = vector.broadcast %3 : vector<1x64xf32> to vector<16x64xf32>
    %5 = arith.addf %2, %4 : vector<16x64xf32>
    %c0_5 = arith.constant 0 : index
    %c0_6 = arith.constant 0 : index
    %6 = vector.load %arg4[%c0_5, %c0_6] : memref<16x64xf32, #tpu.memory_space<vmem>>, vector<16x64xf32>
    %7 = arith.addf %5, %6 : vector<16x64xf32>
    %cst_7 = arith.constant dense<0.000000e+00> : vector<16xf32>
    %8 = vector.multi_reduction <add>, %7, %cst_7 [1] : vector<16x64xf32> to vector<16xf32>
    %9 = vector.shape_cast %8 : vector<16xf32> to vector<16x1xf32>
    %cst_8 = arith.constant 6.400000e+01 : f32
    %10 = vector.broadcast %cst_8 : f32 to vector<16x1xf32>
    %11 = arith.divf %9, %10 : vector<16x1xf32>
    %12 = vector.broadcast %11 : vector<16x1xf32> to vector<16x64xf32>
    %13 = arith.subf %7, %12 : vector<16x64xf32>
    %14 = vector.broadcast %11 : vector<16x1xf32> to vector<16x64xf32>
    %15 = arith.subf %7, %14 : vector<16x64xf32>
    %16 = arith.mulf %13, %15 : vector<16x64xf32>
    %cst_9 = arith.constant dense<0.000000e+00> : vector<16xf32>
    %17 = vector.multi_reduction <add>, %16, %cst_9 [1] : vector<16x64xf32> to vector<16xf32>
    %18 = vector.shape_cast %17 : vector<16xf32> to vector<16x1xf32>
    %cst_10 = arith.constant 6.400000e+01 : f32
    %19 = vector.broadcast %cst_10 : f32 to vector<16x1xf32>
    %20 = arith.divf %18, %19 : vector<16x1xf32>
    %21 = vector.broadcast %11 : vector<16x1xf32> to vector<16x64xf32>
    %22 = arith.subf %7, %21 : vector<16x64xf32>
    %cst_11 = arith.constant 9.99999974E-6 : f32
    %23 = vector.broadcast %cst_11 : f32 to vector<16x1xf32>
    %24 = arith.addf %20, %23 : vector<16x1xf32>
    %25 = math.rsqrt %24 : vector<16x1xf32>
    %26 = vector.broadcast %25 : vector<16x1xf32> to vector<16x64xf32>
    %27 = arith.mulf %22, %26 : vector<16x64xf32>
    %c0_12 = arith.constant 0 : index
    %c0_13 = arith.constant 0 : index
    %28 = vector.load %arg5[%c0_12, %c0_13] : memref<1x64xf32, #tpu.memory_space<vmem>>, vector<1x64xf32>
    %29 = vector.broadcast %28 : vector<1x64xf32> to vector<16x64xf32>
    %30 = arith.mulf %27, %29 : vector<16x64xf32>
    %c0_14 = arith.constant 0 : index
    %c0_15 = arith.constant 0 : index
    %31 = vector.load %arg6[%c0_14, %c0_15] : memref<1x64xf32, #tpu.memory_space<vmem>>, vector<1x64xf32>
    %32 = vector.broadcast %31 : vector<1x64xf32> to vector<16x64xf32>
    %33 = arith.addf %30, %32 : vector<16x64xf32>
    %c0_16 = arith.constant 0 : index
    %c0_17 = arith.constant 0 : index
    %34 = vector.load %arg7[%c0_16, %c0_17] : memref<16x64xf32, #tpu.memory_space<vmem>>, vector<16x64xf32>
    tpu.vector_store %arg7[%c0_16, %c0_17], %33 {strides = array<i32>} : memref<16x64xf32, #tpu.memory_space<vmem>>, vector<16x64xf32>,
    return
  }
  func.func @transform_0(%arg0: i32) -> (i32, i32) {
    %c0_i32 = arith.constant 0 : i32
    %c0_i32_0 = arith.constant 0 : i32
    return %arg0, %c0_i32 : i32, i32
  }
  func.func @transform_1(%arg0: i32) -> (i32, i32) {
    %c0_i32 = arith.constant 0 : i32
    %c0_i32_0 = arith.constant 0 : i32
    %c0_i32_1 = arith.constant 0 : i32
    return %c0_i32, %c0_i32_0 : i32, i32
  }
  func.func @transform_2(%arg0: i32) -> (i32, i32) {
    %c0_i32 = arith.constant 0 : i32
    %c0_i32_0 = arith.constant 0 : i32
    %c0_i32_1 = arith.constant 0 : i32
    return %c0_i32, %c0_i32_0 : i32, i32
  }
  func.func @transform_3(%arg0: i32) -> (i32, i32) {
    %c0_i32 = arith.constant 0 : i32
    %c0_i32_0 = arith.constant 0 : i32
    return %arg0, %c0_i32 : i32, i32
  }
  func.func @transform_4(%arg0: i32) -> (i32, i32) {
    %c0_i32 = arith.constant 0 : i32
    %c0_i32_0 = arith.constant 0 : i32
    %c0_i32_1 = arith.constant 0 : i32
    return %c0_i32, %c0_i32_0 : i32, i32
  }
  func.func @transform_5(%arg0: i32) -> (i32, i32) {
    %c0_i32 = arith.constant 0 : i32
    %c0_i32_0 = arith.constant 0 : i32
    %c0_i32_1 = arith.constant 0 : i32
    return %c0_i32, %c0_i32_0 : i32, i32
  }
  func.func @transform_6(%arg0: i32) -> (i32, i32) {
    %c0_i32 = arith.constant 0 : i32
    %c0_i32_0 = arith.constant 0 : i32
    return %arg0, %c0_i32 : i32, i32
  }
}

module attributes {stable_mosaic.version = 11 : i64} {
  func.func @_ffn_add_ln_kernel(%arg0: i32, %arg1: i32, %arg2: memref<16x64xf32, #tpu.memory_space<vmem>>, %arg3: memref<64x128xf32, #tpu.memory_space<vmem>>, %arg4: memref<1x128xf32, #tpu.memory_space<vmem>>, %arg5: memref<128x64xf32, #tpu.memory_space<vmem>>, %arg6: memref<1x64xf32, #tpu.memory_space<vmem>>, %arg7: memref<1x64xf32, #tpu.memory_space<vmem>>, %arg8: memref<1x64xf32, #tpu.memory_space<vmem>>, %arg9: memref<16x64xf32, #tpu.memory_space<vmem>>, %arg10: memref<16x64xf32, #tpu.memory_space<vmem>>) attributes {dimension_semantics = [#tpu.dimension_semantics<parallel>, #tpu.dimension_semantics<arbitrary>], iteration_bounds = array<i64: 1, 1>, scalar_prefetch = 0 : i64, scratch_operands = 1 : i64, tpu.core_type = #tpu.core_type<tc>, window_params = [{transform_indices = @transform_0, window_bounds = array<i64: 16, 64>}, {transform_indices = @transform_1, window_bounds = array<i64: 64, 128>}, {transform_indices = @transform_2, window_bounds = array<i64: 1, 128>}, {transform_indices = @transform_3, window_bounds = array<i64: 128, 64>}, {pipeline_mode = #tpu.pipeline_mode<synchronous>, transform_indices = @transform_4, window_bounds = array<i64: 1, 64>}, {pipeline_mode = #tpu.pipeline_mode<synchronous>, transform_indices = @transform_5, window_bounds = array<i64: 1, 64>}, {pipeline_mode = #tpu.pipeline_mode<synchronous>, transform_indices = @transform_6, window_bounds = array<i64: 1, 64>}, {transform_indices = @transform_7, window_bounds = array<i64: 16, 64>}]} {
    %c0_i32 = arith.constant 0 : i32
    %0 = arith.cmpi eq, %arg1, %c0_i32 : i32
    %1 = arith.extui %0 : i1 to i32
    %c0_i32_0 = arith.constant 0 : i32
    %2 = arith.cmpi ne, %1, %c0_i32_0 : i32
    scf.if %2 {
      %cst_16 = arith.constant 0.000000e+00 : f32
      %19 = vector.broadcast %cst_16 : f32 to vector<16x64xf32>
      %c0_17 = arith.constant 0 : index
      %c0_18 = arith.constant 0 : index
      %20 = vector.load %arg10[%c0_17, %c0_18] : memref<16x64xf32, #tpu.memory_space<vmem>>, vector<16x64xf32>
      tpu.vector_store %arg10[%c0_17, %c0_18], %19 {strides = array<i32>} : memref<16x64xf32, #tpu.memory_space<vmem>>, vector<16x64xf32>,
    } else {
    }
    %c0 = arith.constant 0 : index
    %c0_1 = arith.constant 0 : index
    %3 = vector.load %arg2[%c0, %c0_1] : memref<16x64xf32, #tpu.memory_space<vmem>>, vector<16x64xf32>
    %c0_2 = arith.constant 0 : index
    %c0_3 = arith.constant 0 : index
    %4 = vector.load %arg3[%c0_2, %c0_3] : memref<64x128xf32, #tpu.memory_space<vmem>>, vector<64x128xf32>
    %cst = arith.constant dense<0.000000e+00> : vector<16x128xf32>
    %5 = tpu.matmul %3, %4, %cst {dimension_numbers = #tpu.dot_dimension_numbers<[1], [0], [0], [1], [0, 0, 1, 1], [], []>} : vector<16x64xf32>, vector<64x128xf32>, vector<16x128xf32> -> vector<16x128xf32>
    %c0_4 = arith.constant 0 : index
    %c0_5 = arith.constant 0 : index
    %6 = vector.load %arg4[%c0_4, %c0_5] : memref<1x128xf32, #tpu.memory_space<vmem>>, vector<1x128xf32>
    %7 = vector.broadcast %6 : vector<1x128xf32> to vector<16x128xf32>
    %8 = arith.addf %5, %7 : vector<16x128xf32>
    %cst_6 = arith.constant 0.000000e+00 : f32
    %9 = vector.broadcast %cst_6 : f32 to vector<16x128xf32>
    %10 = arith.maximumf %8, %9 : vector<16x128xf32>
    %c0_7 = arith.constant 0 : index
    %c0_8 = arith.constant 0 : index
    %11 = vector.load %arg10[%c0_7, %c0_8] : memref<16x64xf32, #tpu.memory_space<vmem>>, vector<16x64xf32>
    %c0_9 = arith.constant 0 : index
    %c0_10 = arith.constant 0 : index
    %12 = vector.load %arg5[%c0_9, %c0_10] : memref<128x64xf32, #tpu.memory_space<vmem>>, vector<128x64xf32>
    %cst_11 = arith.constant dense<0.000000e+00> : vector<16x64xf32>
    %13 = tpu.matmul %10, %12, %cst_11 {dimension_numbers = #tpu.dot_dimension_numbers<[1], [0], [0], [1], [0, 0, 1, 1], [], []>} : vector<16x128xf32>, vector<128x64xf32>, vector<16x64xf32> -> vector<16x64xf32>
    %14 = arith.addf %11, %13 : vector<16x64xf32>
    %c0_12 = arith.constant 0 : index
    %c0_13 = arith.constant 0 : index
    %15 = vector.load %arg10[%c0_12, %c0_13] : memref<16x64xf32, #tpu.memory_space<vmem>>, vector<16x64xf32>
    tpu.vector_store %arg10[%c0_12, %c0_13], %14 {strides = array<i32>} : memref<16x64xf32, #tpu.memory_space<vmem>>, vector<16x64xf32>,
    %c0_i32_14 = arith.constant 0 : i32
    %16 = arith.cmpi eq, %arg1, %c0_i32_14 : i32
    %17 = arith.extui %16 : i1 to i32
    %c0_i32_15 = arith.constant 0 : i32
    %18 = arith.cmpi ne, %17, %c0_i32_15 : i32
    scf.if %18 {
      %c0_16 = arith.constant 0 : index
      %c0_17 = arith.constant 0 : index
      %19 = vector.load %arg10[%c0_16, %c0_17] : memref<16x64xf32, #tpu.memory_space<vmem>>, vector<16x64xf32>
      %c0_18 = arith.constant 0 : index
      %c0_19 = arith.constant 0 : index
      %20 = vector.load %arg6[%c0_18, %c0_19] : memref<1x64xf32, #tpu.memory_space<vmem>>, vector<1x64xf32>
      %21 = vector.broadcast %20 : vector<1x64xf32> to vector<16x64xf32>
      %22 = arith.addf %19, %21 : vector<16x64xf32>
      %23 = arith.addf %22, %3 : vector<16x64xf32>
      %cst_20 = arith.constant dense<0.000000e+00> : vector<16xf32>
      %24 = vector.multi_reduction <add>, %23, %cst_20 [1] : vector<16x64xf32> to vector<16xf32>
      %25 = vector.shape_cast %24 : vector<16xf32> to vector<16x1xf32>
      %cst_21 = arith.constant 6.400000e+01 : f32
      %26 = vector.broadcast %cst_21 : f32 to vector<16x1xf32>
      %27 = arith.divf %25, %26 : vector<16x1xf32>
      %28 = vector.broadcast %27 : vector<16x1xf32> to vector<16x64xf32>
      %29 = arith.subf %23, %28 : vector<16x64xf32>
      %30 = vector.broadcast %27 : vector<16x1xf32> to vector<16x64xf32>
      %31 = arith.subf %23, %30 : vector<16x64xf32>
      %32 = arith.mulf %29, %31 : vector<16x64xf32>
      %cst_22 = arith.constant dense<0.000000e+00> : vector<16xf32>
      %33 = vector.multi_reduction <add>, %32, %cst_22 [1] : vector<16x64xf32> to vector<16xf32>
      %34 = vector.shape_cast %33 : vector<16xf32> to vector<16x1xf32>
      %cst_23 = arith.constant 6.400000e+01 : f32
      %35 = vector.broadcast %cst_23 : f32 to vector<16x1xf32>
      %36 = arith.divf %34, %35 : vector<16x1xf32>
      %37 = vector.broadcast %27 : vector<16x1xf32> to vector<16x64xf32>
      %38 = arith.subf %23, %37 : vector<16x64xf32>
      %cst_24 = arith.constant 9.99999974E-6 : f32
      %39 = vector.broadcast %cst_24 : f32 to vector<16x1xf32>
      %40 = arith.addf %36, %39 : vector<16x1xf32>
      %41 = math.rsqrt %40 : vector<16x1xf32>
      %42 = vector.broadcast %41 : vector<16x1xf32> to vector<16x64xf32>
      %43 = arith.mulf %38, %42 : vector<16x64xf32>
      %c0_25 = arith.constant 0 : index
      %c0_26 = arith.constant 0 : index
      %44 = vector.load %arg7[%c0_25, %c0_26] : memref<1x64xf32, #tpu.memory_space<vmem>>, vector<1x64xf32>
      %45 = vector.broadcast %44 : vector<1x64xf32> to vector<16x64xf32>
      %46 = arith.mulf %43, %45 : vector<16x64xf32>
      %c0_27 = arith.constant 0 : index
      %c0_28 = arith.constant 0 : index
      %47 = vector.load %arg8[%c0_27, %c0_28] : memref<1x64xf32, #tpu.memory_space<vmem>>, vector<1x64xf32>
      %48 = vector.broadcast %47 : vector<1x64xf32> to vector<16x64xf32>
      %49 = arith.addf %46, %48 : vector<16x64xf32>
      %c0_29 = arith.constant 0 : index
      %c0_30 = arith.constant 0 : index
      %50 = vector.load %arg9[%c0_29, %c0_30] : memref<16x64xf32, #tpu.memory_space<vmem>>, vector<16x64xf32>
      tpu.vector_store %arg9[%c0_29, %c0_30], %49 {strides = array<i32>} : memref<16x64xf32, #tpu.memory_space<vmem>>, vector<16x64xf32>,
    } else {
    }
    return
  }
  func.func @transform_0(%arg0: i32, %arg1: i32) -> (i32, i32) {
    %c0_i32 = arith.constant 0 : i32
    %c0_i32_0 = arith.constant 0 : i32
    return %arg0, %c0_i32 : i32, i32
  }
  func.func @transform_1(%arg0: i32, %arg1: i32) -> (i32, i32) {
    %c0_i32 = arith.constant 0 : i32
    %c0_i32_0 = arith.constant 0 : i32
    return %c0_i32, %arg1 : i32, i32
  }
  func.func @transform_2(%arg0: i32, %arg1: i32) -> (i32, i32) {
    %c0_i32 = arith.constant 0 : i32
    %c0_i32_0 = arith.constant 0 : i32
    return %c0_i32, %arg1 : i32, i32
  }
  func.func @transform_3(%arg0: i32, %arg1: i32) -> (i32, i32) {
    %c0_i32 = arith.constant 0 : i32
    %c0_i32_0 = arith.constant 0 : i32
    return %arg1, %c0_i32 : i32, i32
  }
  func.func @transform_4(%arg0: i32, %arg1: i32) -> (i32, i32) {
    %c0_i32 = arith.constant 0 : i32
    %c0_i32_0 = arith.constant 0 : i32
    %c0_i32_1 = arith.constant 0 : i32
    return %c0_i32, %c0_i32_0 : i32, i32
  }
  func.func @transform_5(%arg0: i32, %arg1: i32) -> (i32, i32) {
    %c0_i32 = arith.constant 0 : i32
    %c0_i32_0 = arith.constant 0 : i32
    %c0_i32_1 = arith.constant 0 : i32
    return %c0_i32, %c0_i32_0 : i32, i32
  }
  func.func @transform_6(%arg0: i32, %arg1: i32) -> (i32, i32) {
    %c0_i32 = arith.constant 0 : i32
    %c0_i32_0 = arith.constant 0 : i32
    %c0_i32_1 = arith.constant 0 : i32
    return %c0_i32, %c0_i32_0 : i32, i32
  }
  func.func @transform_7(%arg0: i32, %arg1: i32) -> (i32, i32) {
    %c0_i32 = arith.constant 0 : i32
    %c0_i32_0 = arith.constant 0 : i32
    return %arg0, %c0_i32 : i32, i32
  }
}

module attributes {stable_mosaic.version = 11 : i64} {
  func.func @_proj_split_kernel(%arg0: i32, %arg1: memref<16x64xf32, #tpu.memory_space<vmem>>, %arg2: memref<64x64xf32, #tpu.memory_space<vmem>>, %arg3: memref<1x64xf32, #tpu.memory_space<vmem>>, %arg4: memref<16x64xf32, #tpu.memory_space<vmem>>) attributes {dimension_semantics = [#tpu.dimension_semantics<parallel>], iteration_bounds = array<i64: 1>, scalar_prefetch = 0 : i64, scratch_operands = 0 : i64, tpu.core_type = #tpu.core_type<tc>, window_params = [{transform_indices = @transform_0, window_bounds = array<i64: 16, 64>}, {pipeline_mode = #tpu.pipeline_mode<synchronous>, transform_indices = @transform_1, window_bounds = array<i64: 64, 64>}, {pipeline_mode = #tpu.pipeline_mode<synchronous>, transform_indices = @transform_2, window_bounds = array<i64: 1, 64>}, {transform_indices = @transform_3, window_bounds = array<i64: 16, 64>}]} {
    %c0 = arith.constant 0 : index
    %c0_0 = arith.constant 0 : index
    %0 = vector.load %arg1[%c0, %c0_0] : memref<16x64xf32, #tpu.memory_space<vmem>>, vector<16x64xf32>
    %c0_1 = arith.constant 0 : index
    %c0_2 = arith.constant 0 : index
    %1 = vector.load %arg2[%c0_1, %c0_2] : memref<64x64xf32, #tpu.memory_space<vmem>>, vector<64x64xf32>
    %cst = arith.constant dense<0.000000e+00> : vector<16x64xf32>
    %2 = tpu.matmul %0, %1, %cst {dimension_numbers = #tpu.dot_dimension_numbers<[1], [0], [0], [1], [0, 0, 1, 1], [], []>} : vector<16x64xf32>, vector<64x64xf32>, vector<16x64xf32> -> vector<16x64xf32>
    %c0_3 = arith.constant 0 : index
    %c0_4 = arith.constant 0 : index
    %3 = vector.load %arg3[%c0_3, %c0_4] : memref<1x64xf32, #tpu.memory_space<vmem>>, vector<1x64xf32>
    %4 = vector.broadcast %3 : vector<1x64xf32> to vector<16x64xf32>
    %5 = arith.addf %2, %4 : vector<16x64xf32>
    %c0_5 = arith.constant 0 : index
    %c0_6 = arith.constant 0 : index
    %6 = vector.load %arg4[%c0_5, %c0_6] : memref<16x64xf32, #tpu.memory_space<vmem>>, vector<16x64xf32>
    tpu.vector_store %arg4[%c0_5, %c0_6], %5 {strides = array<i32>} : memref<16x64xf32, #tpu.memory_space<vmem>>, vector<16x64xf32>,
    return
  }
  func.func @transform_0(%arg0: i32) -> (i32, i32) {
    %c0_i32 = arith.constant 0 : i32
    %c0_i32_0 = arith.constant 0 : i32
    return %arg0, %c0_i32 : i32, i32
  }
  func.func @transform_1(%arg0: i32) -> (i32, i32) {
    %c0_i32 = arith.constant 0 : i32
    %c0_i32_0 = arith.constant 0 : i32
    %c0_i32_1 = arith.constant 0 : i32
    return %c0_i32, %c0_i32_0 : i32, i32
  }
  func.func @transform_2(%arg0: i32) -> (i32, i32) {
    %c0_i32 = arith.constant 0 : i32
    %c0_i32_0 = arith.constant 0 : i32
    %c0_i32_1 = arith.constant 0 : i32
    return %c0_i32, %c0_i32_0 : i32, i32
  }
  func.func @transform_3(%arg0: i32) -> (i32, i32) {
    %c0_i32 = arith.constant 0 : i32
    %c0_i32_0 = arith.constant 0 : i32
    return %arg0, %c0_i32 : i32, i32
  }
}

</mosaic_0001>

<llo_original>
// kernel: decoder_layer.8
$region0: #{decoder_layer.8}
  #allocation0 [shape = 'u32[]', space=smem, size = 0x4, offset = 0x4, fixed_abs, tag = 'smem constant byte address 0x4 - core index']
  #allocation1 [shape = 'u32[144,128]{1,0:T(1,128)}', space=vmem, size = 0x12000, scoped, tag = 'internal scratch']
  %s0 = inlined_call_operand.vmem [shape: f32[16,64], index: 0, kind: input, shape index: {}]
  %s1 = inlined_call_operand.vmem [shape: f32[64,192], index: 1, kind: input, shape index: {}]
  %s2 = inlined_call_operand.vmem [shape: f32[1,192], index: 2, kind: input, shape index: {}]
  %s3 = inlined_call_operand.vmem [shape: f32[16,64], index: 3, kind: output, shape index: {0}]
  %s4 = inlined_call_operand.vmem [shape: f32[16,64], index: 4, kind: output, shape index: {1}]
  %s5 = inlined_call_operand.vmem [shape: f32[16,64], index: 5, kind: output, shape index: {2}]
  %6 = xla_tuple %s3, %s4, %s5
  %s7 = sld [smem:[#allocation0]]
  $region38: #{decoder_layer.8} parent=0
    _
  %s9 = ssub.s32 1, %s7
  %s10 = scalar_select 0, %s9, %s7
  // Predicated region
  $region2: #{decoder_layer.8} parent=0 // pred_check
    _
  $region3: #{decoder_layer.8} parent=0 // pred_check_branch
    %12 = sbr.rel (0) target = $region5
  $region4: #{decoder_layer.8} parent=0 // pred_region
    _
  $region5: #{decoder_layer.8} parent=0 // pred_fallthru
    _
  // Predicated region
  $region6: #{decoder_layer.8} parent=0 // pred_check
    _
  $region7: #{decoder_layer.8} parent=0 // pred_check_branch
    %14 = sbr.rel (0) target = $region9
  $region8: #{decoder_layer.8} parent=0 // pred_region
    _
  $region9: #{decoder_layer.8} parent=0 // pred_fallthru
    _
  // Predicated region
  $region10: #{decoder_layer.8} parent=0 // pred_check
    _
  $region11: #{decoder_layer.8} parent=0 // pred_check_branch
    %16 = sbr.rel (0) target = $region13
  $region12: #{decoder_layer.8} parent=0 // pred_region
    _
  $region13: #{decoder_layer.8} parent=0 // pred_fallthru
    _
  %v17 = vld [vmem:[%s0] sm:$0xff]
  %v18 = vld [vmem:[%s0 + $0x8] sm:$0xff]
  %v19 = vld [vmem:[%s1] sm:$0xff]
  %v20 = vld [vmem:[%s1 + $0x8] sm:$0xff]
  %v21 = vld [vmem:[%s1 + $0x10] sm:$0xff]
  %v22 = vld [vmem:[%s1 + $0x18] sm:$0xff]
  %v23 = vld [vmem:[%s1 + $0x20] sm:$0xff]
  %v24 = vld [vmem:[%s1 + $0x28] sm:$0xff]
  %v25 = vld [vmem:[%s1 + $0x30] sm:$0xff]
  %v26 = vld [vmem:[%s1 + $0x38] sm:$0xff]
  %v27 = vld [vmem:[%s1 + $0x40] sm:$0xff]
  %v28 = vld [vmem:[%s1 + $0x48] sm:$0xff]
  %v29 = vld [vmem:[%s1 + $0x50] sm:$0xff]
  %v30 = vld [vmem:[%s1 + $0x58] sm:$0xff]
  %v31 = vld [vmem:[%s1 + $0x60] sm:$0xff]
  %v32 = vld [vmem:[%s1 + $0x68] sm:$0xff]
  %v33 = vld [vmem:[%s1 + $0x70] sm:$0xff]
  %v34 = vld [vmem:[%s1 + $0x78] sm:$0xff]
  %v35 = vld [vmem:[%s2] sm:$0x3]
  %v37 = vlaneseq
  %v38 = vshrl.u32 %v37, 7
  %v39 = vsub.s32 0, %v38
  %v40 = vrot.slane %v35, %v39
  %v41 = vlaneseq
  %v42 = vshrl.u32 %v41, 7
  %v43 = vsub.s32 1, %v42
  %v44 = vrot.slane %v35, %v43
  %vm47 = vcmask 523264
  %v49 = vsel %vm47, %v17, 0
  %v52 = vsel %vm47, %v18, 0
  %54 = vmatprep.subr.mxu0 0.0
  %55 = vmatpush1.msra.mxu0 0.0
  %56 = vmatprep.subr.mxu0 0.0
  %57 = vmatpush1.msra.mxu0 0.0
  %58 = vmatprep.subr.mxu0 0.0
  %59 = vmatpush1.msra.mxu0 0.0
  %60 = vmatprep.subr.mxu0 0.0
  %61 = vmatpush1.msra.mxu0 0.0
  %62 = vmatprep.subr.mxu0 0.0
  %63 = vmatpush1.msra.mxu0 0.0
  %64 = vmatprep.subr.mxu0 0.0
  %65 = vmatpush1.msra.mxu0 0.0
  %66 = vmatprep.subr.mxu0 0.0
  %67 = vmatpush1.msra.mxu0 0.0
  %68 = vmatprep.subr.mxu0 0.0
  %69 = vmatpush1.msra.mxu0 0.0
  %70 = vmatprep.subr.mxu0 %v34
  %71 = vmatpush1.msra.mxu0 %v33
  %72 = vmatprep.subr.mxu0 %v32
  %73 = vmatpush1.msra.mxu0 %v31
  %74 = vmatprep.subr.mxu0 %v30
  %75 = vmatpush1.msra.mxu0 %v29
  %76 = vmatprep.subr.mxu0 %v28
  %77 = vmatpush1.msra.mxu0 %v27
  %78 = vmatprep.subr.mxu0 %v26
  %79 = vmatpush1.msra.mxu0 %v25
  %80 = vmatprep.subr.mxu0 %v24
  %81 = vmatpush1.msra.mxu0 %v23
  %82 = vmatprep.subr.mxu0 %v22
  %83 = vmatpush1.msra.mxu0 %v21
  %84 = vmatprep.subr.mxu0 %v20
  %85 = vmatpush1.msra.mxu0 %v19
  %86 = vmatprep.subr.mxu0 0.0
  %87 = vmatpush2.msra.mxu0 0.0
  %88 = vmatprep.subr.mxu0 0.0
  %89 = vmatpush2.msra.mxu0 0.0
  %90 = vmatprep.subr.mxu0 0.0
  %91 = vmatpush2.msra.mxu0 0.0
  %92 = vmatprep.subr.mxu0 0.0
  %93 = vmatpush2.msra.mxu0 0.0
  %94 = vmatprep.subr.mxu0 0.0
  %95 = vmatpush2.msra.mxu0 0.0
  %96 = vmatprep.subr.mxu0 0.0
  %97 = vmatpush2.msra.mxu0 0.0
  %98 = vmatprep.subr.mxu0 0.0
  %99 = vmatpush2.msra.mxu0 0.0
  %100 = vmatprep.subr.mxu0 0.0
  %101 = vmatpush2.msra.mxu0 0.0
  %102 = vmatprep.subr.mxu0 0.0
  %103 = vmatpush2.msra.mxu0 0.0
  %104 = vmatprep.subr.mxu0 0.0
  %105 = vmatpush2.msra.mxu0 0.0
  %106 = vmatprep.subr.mxu0 0.0
  %107 = vmatpush2.msra.mxu0 0.0
  %108 = vmatprep.subr.mxu0 0.0
  %109 = vmatpush2.msra.mxu0 0.0
  %110 = vmatprep.subr.mxu0 0.0
  %111 = vmatpush2.msra.mxu0 0.0
  %112 = vmatprep.subr.mxu0 0.0
  %113 = vmatpush2.msra.mxu0 0.0
  %114 = vmatprep.subr.mxu0 0.0
  %115 = vmatpush2.msra.mxu0 0.0
  %116 = vmatprep.subr.mxu0 0.0
  %117 = vmatpush2.msra.mxu0 0.0
  %118 = vmatprep.mubr.f32.mxu0 0.0
  %119 = vmatmul.mubr.f32.gmra.mxu0 %v49
  %v120 = vpop.f32.mrf.mxu0
  %v121 = vadd.f32 %v40, %v120
  %v122 = vpop.f32.mrf.mxu0
  %v123 = vadd.f32 %v44, %v122
  %124 = vmatprep.mubr.f32.mxu0 0.0
  %125 = vmatmul.mubr.f32.gmra.mxu0 %v52
  %v126 = vpop.f32.mrf.mxu0
  %v127 = vadd.f32 %v40, %v126
  %v128 = vpop.f32.mrf.mxu0
  %v129 = vadd.f32 %v44, %v128
  %130 = vdwg.mxu0
  %131 = vst.msk [vmem:[%s3] sm:$0xff] %vm47, %v121
  %132 = vst.msk [vmem:[%s3 + $0x8] sm:$0xff] %vm47, %v127
  %135 = vrot.lane.b32.xlu0 %v121, 64
  %v136 = vpop.permute.xlu0 %135
  %137 = vrot.lane.b32.xlu0 %v127, 64
  %v138 = vpop.permute.xlu0 %137
  %141 = vst.msk [vmem:[%s4] sm:$0xff] %vm47, %v136
  %142 = vst.msk [vmem:[%s4 + $0x8] sm:$0xff] %vm47, %v138
  %143 = vst.msk [vmem:[%s5] sm:$0xff] %vm47, %v123
  %144 = vst.msk [vmem:[%s5 + $0x8] sm:$0xff] %vm47, %v129
  // Predicated region
  $region14: #{decoder_layer.8} parent=0 // pred_check
    _
  $region15: #{decoder_layer.8} parent=0 // pred_check_branch
    %146 = sbr.rel (0) target = $region17
  $region16: #{decoder_layer.8} parent=0 // pred_region
    _
  $region17: #{decoder_layer.8} parent=0 // pred_fallthru
    _
  // Predicated region
  $region18: #{decoder_layer.8} parent=0 // pred_check
    _
  $region19: #{decoder_layer.8} parent=0 // pred_check_branch
    %148 = sbr.rel (0) target = $region21
  $region20: #{decoder_layer.8} parent=0 // pred_region
    _
  $region21: #{decoder_layer.8} parent=0 // pred_fallthru
    _
  // Predicated region
  $region22: #{decoder_layer.8} parent=0 // pred_check
    _
  $region23: #{decoder_layer.8} parent=0 // pred_check_branch
    %150 = sbr.rel (0) target = $region25
  $region24: #{decoder_layer.8} parent=0 // pred_region
    _
  $region25: #{decoder_layer.8} parent=0 // pred_fallthru
    _
  // Predicated region
  $region26: #{decoder_layer.8} parent=0 // pred_check
    _
  $region27: #{decoder_layer.8} parent=0 // pred_check_branch
    %152 = sbr.rel (0) target = $region29
  $region28: #{decoder_layer.8} parent=0 // pred_region
    _
  $region29: #{decoder_layer.8} parent=0 // pred_fallthru
    _
  // Predicated region
  $region30: #{decoder_layer.8} parent=0 // pred_check
    _
  $region31: #{decoder_layer.8} parent=0 // pred_check_branch
    %154 = sbr.rel (0) target = $region33
  $region32: #{decoder_layer.8} parent=0 // pred_region
    _
  $region33: #{decoder_layer.8} parent=0 // pred_fallthru
    _
  // Predicated region
  $region34: #{decoder_layer.8} parent=0 // pred_check
    _
  $region35: #{decoder_layer.8} parent=0 // pred_check_branch
    %156 = sbr.rel (0) target = $region37
  $region36: #{decoder_layer.8} parent=0 // pred_region
    _
  $region37: #{decoder_layer.8} parent=0 // pred_fallthru
    _

// kernel: decoder_layer.12
$region0: #{decoder_layer.12}
  #allocation0 [shape = 'u32[]', space=smem, size = 0x4, offset = 0x4, fixed_abs, tag = 'smem constant byte address 0x4 - core index']
  #allocation1 [shape = 'u32[144,128]{1,0:T(1,128)}', space=vmem, size = 0x12000, scoped, tag = 'internal scratch']
  %s0 = inlined_call_operand.hbm [shape: f32[16,64], index: 0, kind: input, shape index: {}]
  %s1 = inlined_call_operand.hbm [shape: f32[64,128], index: 1, kind: input, shape index: {}]
  %s2 = inlined_call_operand.hbm [shape: f32[1,128], index: 2, kind: input, shape index: {}]
  %s3 = inlined_call_operand.vmem [shape: f32[16,64], index: 3, kind: output, shape index: {0}]
  %s4 = inlined_call_operand.vmem [shape: f32[16,64], index: 4, kind: output, shape index: {1}]
  %5 = xla_tuple %s3, %s4
  %s6 = sld [smem:[#allocation0]]
  $region42: #{decoder_layer.12} parent=0
    _
  %s8 = ssub.s32 1, %s6
  %s9 = scalar_select 0, %s8, %s6
  $region1: #{decoder_layer.12} parent=0
    #allocation2 [shape = 'u8[8192]{0}', space=vmem, size = 0x2000, scoped, tag = 'input window, operand 0, single buffered']
    #allocation3 [shape = 's32[1]{0}', space=sflag, size = 0x4, scoped, tag = 'scoped memory for decoder_layer.12']
    #allocation4 [shape = 'u8[32768]{0}', space=vmem, size = 0x8000, scoped, tag = 'input window, operand 1, single buffered']
    #allocation5 [shape = 's32[1]{0}', space=sflag, size = 0x4, scoped, tag = 'scoped memory for decoder_layer.12']
    #allocation6 [shape = 'u8[512]{0}', space=vmem, size = 0x400, scoped, tag = 'input window, operand 2, single buffered']
    %10 = vsyncpa [#allocation3], 0
    %11 = vsyncpa [#allocation5], 0
    // Predicated region
    $region2: #{decoder_layer.12} parent=1 // pred_check
      _
    $region3: #{decoder_layer.12} parent=1 // pred_check_branch
      %13 = sbr.rel (0) target = $region5
    $region4: #{decoder_layer.12} parent=1 // pred_region
      %s15 = ssub.s32 256, 256
      %16 = vsyncadd [#allocation3], %s15
      %s17 = sshll.u32 [#allocation2], 4
      %s18 = int_to_ptr.vmem [resolvable:$true] %s17
      %23 = dma.hbm_to_vmem [thread:$0]  %s0, 256, %s18, [#allocation3], 128, 128, 8
    $region5: #{decoder_layer.12} parent=1 // pred_fallthru
      _
    // Predicated region
    $region6: #{decoder_layer.12} parent=1 // pred_check
      _
    $region7: #{decoder_layer.12} parent=1 // pred_check_branch
      %25 = sbr.rel (0) target = $region9
    $region8: #{decoder_layer.12} parent=1 // pred_region
      %s27 = ssub.s32 1024, 1024
      %28 = vsyncadd [#allocation5], %s27
      %s29 = sshll.u32 [#allocation4], 4
      %s30 = int_to_ptr.vmem [resolvable:$true] %s29
      %35 = dma.hbm_to_vmem [thread:$0]  %s1, 1024, %s30, [#allocation5], 128, 128, 8
    $region9: #{decoder_layer.12} parent=1 // pred_fallthru
      _
    // Predicated region
    $region10: #{decoder_layer.12} parent=1 // pred_check
      _
    $region11: #{decoder_layer.12} parent=1 // pred_check_branch
      %37 = sbr.rel (0) target = $region13
    $region12: #{decoder_layer.12} parent=1 // pred_region
      %s39 = ssub.s32 16, 16
      %40 = vsyncadd [#allocation5], %s39
      %s42 = sshll.u32 [#allocation6], 4
      %s43 = int_to_ptr.vmem [resolvable:$true] %s42
      %45 = dma.hbm_to_vmem [thread:$0]  %s2, 16, %s43, [#allocation5]
    $region13: #{decoder_layer.12} parent=1 // pred_fallthru
      _
    // Predicated region
    $region14: #{decoder_layer.12} parent=1 // pred_check
      _
    $region15: #{decoder_layer.12} parent=1 // pred_check_branch
      %47 = sbr.rel (0) target = $region17
    $region16: #{decoder_layer.12} parent=1 // pred_region
      %48 = dma.done [#allocation3], 256
    $region17: #{decoder_layer.12} parent=1 // pred_fallthru
      _
    // Predicated region
    $region18: #{decoder_layer.12} parent=1 // pred_check
      _
    $region19: #{decoder_layer.12} parent=1 // pred_check_branch
      %50 = sbr.rel (0) target = $region21
    $region20: #{decoder_layer.12} parent=1 // pred_region
      %51 = dma.done [#allocation5], 1024
    $region21: #{decoder_layer.12} parent=1 // pred_fallthru
      _
    // Predicated region
    $region22: #{decoder_layer.12} parent=1 // pred_check
      _
    $region23: #{decoder_layer.12} parent=1 // pred_check_branch
      %53 = sbr.rel (0) target = $region25
    $region24: #{decoder_layer.12} parent=1 // pred_region
      %54 = dma.done [#allocation5], 16
    $region25: #{decoder_layer.12} parent=1 // pred_fallthru
      _
    %v55 = vld [vmem:[#allocation2] sm:$0xff]
    %v56 = vld [vmem:[#allocation2 + $0x8] sm:$0xff]
    %v57 = vld [vmem:[#allocation4] sm:$0xff]
    %v58 = vld [vmem:[#allocation4 + $0x8] sm:$0xff]
    %v59 = vld [vmem:[#allocation4 + $0x10] sm:$0xff]
    %v60 = vld [vmem:[#allocation4 + $0x18] sm:$0xff]
    %v61 = vld [vmem:[#allocation4 + $0x20] sm:$0xff]
    %v62 = vld [vmem:[#allocation4 + $0x28] sm:$0xff]
    %v63 = vld [vmem:[#allocation4 + $0x30] sm:$0xff]
    %v64 = vld [vmem:[#allocation4 + $0x38] sm:$0xff]
    %v65 = vld [vmem:[#allocation6] sm:$0x1]
    %v67 = vlaneseq
    %v68 = vshrl.u32 %v67, 7
    %v69 = vsub.s32 0, %v68
    %v70 = vrot.slane %v65, %v69
    %vm72 = vcmask 523264
    %v74 = vsel %vm72, %v55, 0
    %v77 = vsel %vm72, %v56, 0
    %79 = vmatprep.subr.mxu0 0.0
    %80 = vmatpush1.msra.mxu0 0.0
    %81 = vmatprep.subr.mxu0 0.0
    %82 = vmatpush1.msra.mxu0 0.0
    %83 = vmatprep.subr.mxu0 0.0
    %84 = vmatpush1.msra.mxu0 0.0
    %85 = vmatprep.subr.mxu0 0.0
    %86 = vmatpush1.msra.mxu0 0.0
    %87 = vmatprep.subr.mxu0 0.0
    %88 = vmatpush1.msra.mxu0 0.0
    %89 = vmatprep.subr.mxu0 0.0
    %90 = vmatpush1.msra.mxu0 0.0
    %91 = vmatprep.subr.mxu0 0.0
    %92 = vmatpush1.msra.mxu0 0.0
    %93 = vmatprep.subr.mxu0 0.0
    %94 = vmatpush1.msra.mxu0 0.0
    %95 = vmatprep.subr.mxu0 0.0
    %96 = vmatpush1.msra.mxu0 %v64
    %97 = vmatprep.subr.mxu0 0.0
    %98 = vmatpush1.msra.mxu0 %v63
    %99 = vmatprep.subr.mxu0 0.0
    %100 = vmatpush1.msra.mxu0 %v62
    %101 = vmatprep.subr.mxu0 0.0
    %102 = vmatpush1.msra.mxu0 %v61
    %103 = vmatprep.subr.mxu0 0.0
    %104 = vmatpush1.msra.mxu0 %v60
    %105 = vmatprep.subr.mxu0 0.0
    %106 = vmatpush1.msra.mxu0 %v59
    %107 = vmatprep.subr.mxu0 0.0
    %108 = vmatpush1.msra.mxu0 %v58
    %109 = vmatprep.subr.mxu0 0.0
    %110 = vmatpush1.msra.mxu0 %v57
    %111 = vmatprep.subr.mxu0 0.0
    %112 = vmatpush2.msra.mxu0 0.0
    %113 = vmatprep.subr.mxu0 0.0
    %114 = vmatpush2.msra.mxu0 0.0
    %115 = vmatprep.subr.mxu0 0.0
    %116 = vmatpush2.msra.mxu0 0.0
    %117 = vmatprep.subr.mxu0 0.0
    %118 = vmatpush2.msra.mxu0 0.0
    %119 = vmatprep.subr.mxu0 0.0
    %120 = vmatpush2.msra.mxu0 0.0
    %121 = vmatprep.subr.mxu0 0.0
    %122 = vmatpush2.msra.mxu0 0.0
    %123 = vmatprep.subr.mxu0 0.0
    %124 = vmatpush2.msra.mxu0 0.0
    %125 = vmatprep.subr.mxu0 0.0
    %126 = vmatpush2.msra.mxu0 0.0
    %127 = vmatprep.subr.mxu0 0.0
    %128 = vmatpush2.msra.mxu0 0.0
    %129 = vmatprep.subr.mxu0 0.0
    %130 = vmatpush2.msra.mxu0 0.0
    %131 = vmatprep.subr.mxu0 0.0
    %132 = vmatpush2.msra.mxu0 0.0
    %133 = vmatprep.subr.mxu0 0.0
    %134 = vmatpush2.msra.mxu0 0.0
    %135 = vmatprep.subr.mxu0 0.0
    %136 = vmatpush2.msra.mxu0 0.0
    %137 = vmatprep.subr.mxu0 0.0
    %138 = vmatpush2.msra.mxu0 0.0
    %139 = vmatprep.subr.mxu0 0.0
    %140 = vmatpush2.msra.mxu0 0.0
    %141 = vmatprep.subr.mxu0 0.0
    %142 = vmatpush2.msra.mxu0 0.0
    %143 = vmatprep.mubr.f32.mxu0 0.0
    %144 = vmatmul.mubr.f32.gmra.mxu0 %v74
    %v145 = vpop.f32.mrf.mxu0
    %v146 = vadd.f32 %v70, %v145
    %v147 = vpop.f32.mrf.mxu0
    %148 = vmatprep.mubr.f32.mxu0 0.0
    %149 = vmatmul.mubr.f32.gmra.mxu0 %v77
    %v150 = vpop.f32.mrf.mxu0
    %v151 = vadd.f32 %v70, %v150
    %v152 = vpop.f32.mrf.mxu0
    %153 = vdwg.mxu0
    %154 = vst.msk [vmem:[%s3] sm:$0xff] %vm72, %v146
    %155 = vst.msk [vmem:[%s3 + $0x8] sm:$0xff] %vm72, %v151
    %158 = vrot.lane.b32.xlu0 %v146, 64
    %v159 = vpop.permute.xlu0 %158
    %160 = vrot.lane.b32.xlu0 %v151, 64
    %v161 = vpop.permute.xlu0 %160
    %164 = vst.msk [vmem:[%s4] sm:$0xff] %vm72, %v159
    %165 = vst.msk [vmem:[%s4 + $0x8] sm:$0xff] %vm72, %v161
    // Predicated region
    $region26: #{decoder_layer.12} parent=1 // pred_check
      _
    $region27: #{decoder_layer.12} parent=1 // pred_check_branch
      %167 = sbr.rel (0) target = $region29
    $region28: #{decoder_layer.12} parent=1 // pred_region
      _
    $region29: #{decoder_layer.12} parent=1 // pred_fallthru
      _
    // Predicated region
    $region30: #{decoder_layer.12} parent=1 // pred_check
      _
    $region31: #{decoder_layer.12} parent=1 // pred_check_branch
      %169 = sbr.rel (0) target = $region33
    $region32: #{decoder_layer.12} parent=1 // pred_region
      _
    $region33: #{decoder_layer.12} parent=1 // pred_fallthru
      _
    // Predicated region
    $region34: #{decoder_layer.12} parent=1 // pred_check
      _
    $region35: #{decoder_layer.12} parent=1 // pred_check_branch
      %171 = sbr.rel (0) target = $region37
    $region36: #{decoder_layer.12} parent=1 // pred_region
      _
    $region37: #{decoder_layer.12} parent=1 // pred_fallthru
      _
    // Predicated region
    $region38: #{decoder_layer.12} parent=1 // pred_check
      _
    $region39: #{decoder_layer.12} parent=1 // pred_check_branch
      %173 = sbr.rel (0) target = $region41
    $region40: #{decoder_layer.12} parent=1 // pred_region
      _
    $region41: #{decoder_layer.12} parent=1 // pred_fallthru
      _
    %174 = vsyncpa [#allocation3], 1
    %175 = vsyncpa [#allocation5], 1

// kernel: decoder_layer.9
$region0: #{decoder_layer.9}
  #allocation0 [shape = 'u32[]', space=smem, size = 0x4, offset = 0x4, fixed_abs, tag = 'smem constant byte address 0x4 - core index']
  #allocation1 [shape = 'u32[144,128]{1,0:T(1,128)}', space=vmem, size = 0x12000, scoped, tag = 'internal scratch']
  %s0 = inlined_call_operand.vmem [shape: f32[2,8,64], index: 0, kind: input, shape index: {}]
  %s1 = inlined_call_operand.vmem [shape: f32[2,8,64], index: 1, kind: input, shape index: {}]
  %s2 = inlined_call_operand.vmem [shape: f32[2,8,64], index: 2, kind: input, shape index: {}]
  %s3 = inlined_call_operand.vmem [shape: f32[8,8], index: 3, kind: input, shape index: {}]
  %s4 = inlined_call_operand.vmem [shape: f32[2,8,64], index: 4, kind: output, shape index: {}]
  %s5 = sld [smem:[#allocation0]]
  $region49: #{decoder_layer.9} parent=0
    _
  %s7 = ssub.s32 1, %s5
  %s8 = scalar_select 0, %s7, %s5
  loop: start=0, step=1, limit=4
  $region2: #{decoder_layer.9} parent=0 // loop_pre_header
    _
  $region3: #{decoder_layer.9} parent=0 // loop_header
    %s10 = sphi 0, %s14
    %p11 = scmp.ge.s32.totalorder %s10, 4
    %s17 = sphi 0, %s29
    %s18 = sphi 0, %s25
    %s19 = sphi 0, %s17
    %s20 = sphi 0, %s18
    %s21 = sphi 0, %s19
    %s22 = sphi 0, %s20
    %s34 = sphi 0, %s36
    %s37 = sphi 0, %s34
    %s38 = sphi 0, %s37
    %s54 = sphi 0, %s38
    %s60 = sphi 0, %s62
    %s63 = sphi 0, %s60
    %s64 = sphi 0, %s63
    %s80 = sphi 0, %s64
    %s86 = sphi 0, %s88
    %s89 = sphi 0, %s86
    %s90 = sphi 0, %s89
    %s106 = sphi 0, %s90
    %s112 = sphi 0, %s114
    %s115 = sphi 0, %s112
    %s116 = sphi 0, %s115
    %s132 = sphi 0, %s116
    %s140 = sphi 0, %s142
    %s143 = sphi 0, %s140
    %s144 = sphi 0, %s143
    %s160 = sphi 0, %s144
  $region4: #{decoder_layer.9} parent=0 // loop_header_branch
    %13 = sbr.rel (%p11) target = $region8
  $region5: #{decoder_layer.9} parent=0 // loop_body
    %s15 = ssub.s32 %s10, 1
    %s16 = ssub.s32 %s10, 2
    %s23 = sadd.s32 1, %s18
    %p24 = scmp.ge.s32.totalorder %s23, 1
    %s25 = scalar_select %p24, 0, %s23
    %s26 = sadd.s32 1, %s17
    %s27 = scalar_select %p24, %s26, %s17
    %p28 = scmp.ge.s32.totalorder %s27, 2
    %s29 = scalar_select %p28, 0, %s27
    %s30 = ssub.s32 %s17, %s29
    %s31 = ssub.s32 %s18, %s25
    %s32 = sor.u32 %s30, %s31
    %p33 = scmp.eq.s32.totalorder %s32, 0
    %s35 = sadd.s32 %s34, 1
    %s36 = scalar_select %p33, %s34, %s35
    %p39 = pneg %p33
    %p40 = scmp.eq.s32.totalorder %s10, 1
    %p41 = por %p39, %p40
    %p42 = scmp.ne.s32.totalorder %s34, %s37
    %p43 = scmp.eq.s32.totalorder %s10, 0
    %p44 = por %p42, %p43
    %p45 = scmp.ne.s32.totalorder %s34, %s37
    %p46 = scmp.eq.s32.totalorder %s15, 1
    %p47 = por %p45, %p46
    %p48 = scmp.ne.s32.totalorder %s37, %s38
    %p49 = scmp.eq.s32.totalorder %s15, 0
    %p50 = por %p48, %p49
    %p51 = scmp.ne.s32.totalorder %s37, %s38
    %p52 = scmp.eq.s32.totalorder %s16, 1
    %p53 = por %p51, %p52
    %p55 = scmp.ne.s32.totalorder %s38, %s54
    %p56 = scmp.eq.s32.totalorder %s16, 0
    %p57 = por %p55, %p56
    %s58 = ssub.s32 %s17, %s29
    %p59 = scmp.eq.s32.totalorder %s58, 0
    %s61 = sadd.s32 %s60, 1
    %s62 = scalar_select %p59, %s60, %s61
    %p65 = pneg %p59
    %p66 = scmp.eq.s32.totalorder %s10, 1
    %p67 = por %p65, %p66
    %p68 = scmp.ne.s32.totalorder %s60, %s63
    %p69 = scmp.eq.s32.totalorder %s10, 0
    %p70 = por %p68, %p69
    %p71 = scmp.ne.s32.totalorder %s60, %s63
    %p72 = scmp.eq.s32.totalorder %s15, 1
    %p73 = por %p71, %p72
    %p74 = scmp.ne.s32.totalorder %s63, %s64
    %p75 = scmp.eq.s32.totalorder %s15, 0
    %p76 = por %p74, %p75
    %p77 = scmp.ne.s32.totalorder %s63, %s64
    %p78 = scmp.eq.s32.totalorder %s16, 1
    %p79 = por %p77, %p78
    %p81 = scmp.ne.s32.totalorder %s64, %s80
    %p82 = scmp.eq.s32.totalorder %s16, 0
    %p83 = por %p81, %p82
    %s84 = ssub.s32 %s17, %s29
    %p85 = scmp.eq.s32.totalorder %s84, 0
    %s87 = sadd.s32 %s86, 1
    %s88 = scalar_select %p85, %s86, %s87
    %p91 = pneg %p85
    %p92 = scmp.eq.s32.totalorder %s10, 1
    %p93 = por %p91, %p92
    %p94 = scmp.ne.s32.totalorder %s86, %s89
    %p95 = scmp.eq.s32.totalorder %s10, 0
    %p96 = por %p94, %p95
    %p97 = scmp.ne.s32.totalorder %s86, %s89
    %p98 = scmp.eq.s32.totalorder %s15, 1
    %p99 = por %p97, %p98
    %p100 = scmp.ne.s32.totalorder %s89, %s90
    %p101 = scmp.eq.s32.totalorder %s15, 0
    %p102 = por %p100, %p101
    %p103 = scmp.ne.s32.totalorder %s89, %s90
    %p104 = scmp.eq.s32.totalorder %s16, 1
    %p105 = por %p103, %p104
    %p107 = scmp.ne.s32.totalorder %s90, %s106
    %p108 = scmp.eq.s32.totalorder %s16, 0
    %p109 = por %p107, %p108
    %s110 = ssub.s32 %s18, %s25
    %p111 = scmp.eq.s32.totalorder %s110, 0
    %s113 = sadd.s32 %s112, 1
    %s114 = scalar_select %p111, %s112, %s113
    %p117 = pneg %p111
    %p118 = scmp.eq.s32.totalorder %s10, 1
    %p119 = por %p117, %p118
    %p120 = scmp.ne.s32.totalorder %s112, %s115
    %p121 = scmp.eq.s32.totalorder %s10, 0
    %p122 = por %p120, %p121
    %p123 = scmp.ne.s32.totalorder %s112, %s115
    %p124 = scmp.eq.s32.totalorder %s15, 1
    %p125 = por %p123, %p124
    %p126 = scmp.ne.s32.totalorder %s115, %s116
    %p127 = scmp.eq.s32.totalorder %s15, 0
    %p128 = por %p126, %p127
    %p129 = scmp.ne.s32.totalorder %s115, %s116
    %p130 = scmp.eq.s32.totalorder %s16, 1
    %p131 = por %p129, %p130
    %p133 = scmp.ne.s32.totalorder %s116, %s132
    %p134 = scmp.eq.s32.totalorder %s16, 0
    %p135 = por %p133, %p134
    %s136 = ssub.s32 %s17, %s29
    %s137 = ssub.s32 %s18, %s25
    %s138 = sor.u32 %s136, %s137
    %p139 = scmp.eq.s32.totalorder %s138, 0
    %s141 = sadd.s32 %s140, 1
    %s142 = scalar_select %p139, %s140, %s141
    %p145 = pneg %p139
    %p146 = scmp.eq.s32.totalorder %s10, 1
    %p147 = por %p145, %p146
    %p148 = scmp.ne.s32.totalorder %s140, %s143
    %p149 = scmp.eq.s32.totalorder %s10, 0
    %p150 = por %p148, %p149
    %p151 = scmp.ne.s32.totalorder %s140, %s143
    %p152 = scmp.eq.s32.totalorder %s15, 1
    %p153 = por %p151, %p152
    %p154 = scmp.ne.s32.totalorder %s143, %s144
    %p155 = scmp.eq.s32.totalorder %s15, 0
    %p156 = por %p154, %p155
    %p157 = scmp.ne.s32.totalorder %s143, %s144
    %p158 = scmp.eq.s32.totalorder %s16, 1
    %p159 = por %p157, %p158
    %p161 = scmp.ne.s32.totalorder %s144, %s160
    %p162 = scmp.eq.s32.totalorder %s16, 0
    %p163 = por %p161, %p162
    %p164 = scmp.le.s32.totalorder 1, %s10
    %p165 = scmp.lt.s32.totalorder %s10, 3
    %p166 = pnand %p164, %p165
    %p167 = pneg %p166
    // Predicated region
    $region9: #{decoder_layer.9} parent=5 // pred_check
      _
    $region10: #{decoder_layer.9} parent=5 // pred_check_branch
      %169 = sbr.rel (%p166) target = $region12
    $region11: #{decoder_layer.9} parent=5 // pred_region
      %s170 = ssub.s32 %s10, 1
      // Predicated region
      $region13: #{decoder_layer.9} parent=11 // pred_check
        %p171 = pneg %p128
      $region14: #{decoder_layer.9} parent=11 // pred_check_branch
        %173 = sbr.rel (%p171) target = $region16
      $region15: #{decoder_layer.9} parent=11 // pred_region
        %p174 = scmp.lt.s32.totalorder %s20, 0
        %s175 = scalar_select %p174, %s20, 0
        %s176 = smul.addr %s175, 8
        %s177 = scalar_lea.vmem %s3, %s176
      $region16: #{decoder_layer.9} parent=11 // pred_fallthru
        _
    $region12: #{decoder_layer.9} parent=5 // pred_fallthru
      _
    %p178 = scmp.lt.s32.totalorder %s10, 2
    // Predicated region
    $region17: #{decoder_layer.9} parent=5 // pred_check
      %p179 = pneg %p178
    $region18: #{decoder_layer.9} parent=5 // pred_check_branch
      %181 = sbr.rel (%p179) target = $region20
    $region19: #{decoder_layer.9} parent=5 // pred_region
      // Predicated region
      $region21: #{decoder_layer.9} parent=19 // pred_check
        %p182 = pneg %p44
      $region22: #{decoder_layer.9} parent=19 // pred_check_branch
        %184 = sbr.rel (%p182) target = $region24
      $region23: #{decoder_layer.9} parent=19 // pred_region
        %p185 = scmp.lt.s32.totalorder %s17, 1
        %s186 = scalar_select %p185, %s17, 1
        %p187 = scmp.lt.s32.totalorder %s18, 0
        %s188 = scalar_select %p187, %s18, 0
        %s189 = sadd.s32 %s188, %s186
        %s190 = smul.addr %s189, 8
        %s191 = scalar_lea.vmem %s0, %s190
      $region24: #{decoder_layer.9} parent=19 // pred_fallthru
        _
      // Predicated region
      $region25: #{decoder_layer.9} parent=19 // pred_check
        %p192 = pneg %p70
      $region26: #{decoder_layer.9} parent=19 // pred_check_branch
        %194 = sbr.rel (%p192) target = $region28
      $region27: #{decoder_layer.9} parent=19 // pred_region
        %p195 = scmp.lt.s32.totalorder %s17, 1
        %s196 = scalar_select %p195, %s17, 1
        %s197 = smul.addr %s196, 8
        %s198 = scalar_lea.vmem %s1, %s197
      $region28: #{decoder_layer.9} parent=19 // pred_fallthru
        _
      // Predicated region
      $region29: #{decoder_layer.9} parent=19 // pred_check
        %p199 = pneg %p96
      $region30: #{decoder_layer.9} parent=19 // pred_check_branch
        %201 = sbr.rel (%p199) target = $region32
      $region31: #{decoder_layer.9} parent=19 // pred_region
        %p202 = scmp.lt.s32.totalorder %s17, 1
        %s203 = scalar_select %p202, %s17, 1
        %s204 = smul.addr %s203, 8
        %s205 = scalar_lea.vmem %s2, %s204
      $region32: #{decoder_layer.9} parent=19 // pred_fallthru
        _
    $region20: #{decoder_layer.9} parent=5 // pred_fallthru
      _
    %p206 = scmp.le.s32.totalorder 1, %s10
    %p207 = scmp.lt.s32.totalorder %s10, 3
    %p208 = pnand %p206, %p207
    %p209 = pneg %p208
    // Predicated region
    $region33: #{decoder_layer.9} parent=5 // pred_check
      _
    $region34: #{decoder_layer.9} parent=5 // pred_check_branch
      %211 = sbr.rel (%p208) target = $region36
    $region35: #{decoder_layer.9} parent=5 // pred_region
      %s212 = ssub.s32 %s10, 1
      %p213 = scmp.lt.s32.totalorder %s19, 1
      %s214 = scalar_select %p213, %s19, 1
      %p215 = scmp.lt.s32.totalorder %s20, 0
      %s216 = scalar_select %p215, %s20, 0
      %s217 = sadd.s32 %s216, %s214
      %s218 = smul.addr %s217, 8
      %s219 = scalar_lea.vmem %s0, %s218
      %p220 = pneg %p50
      %p221 = pneg %p47
      %p222 = scmp.lt.s32.totalorder %s19, 1
      %s223 = scalar_select %p222, %s19, 1
      %s224 = smul.addr %s223, 8
      %s225 = scalar_lea.vmem %s1, %s224
      %p226 = pneg %p76
      %p227 = pneg %p73
      %p228 = scmp.lt.s32.totalorder %s19, 1
      %s229 = scalar_select %p228, %s19, 1
      %s230 = smul.addr %s229, 8
      %s231 = scalar_lea.vmem %s2, %s230
      %p232 = pneg %p102
      %p233 = pneg %p99
      %p234 = scmp.lt.s32.totalorder %s20, 0
      %s235 = scalar_select %p234, %s20, 0
      %s236 = smul.addr %s235, 8
      %s237 = scalar_lea.vmem %s3, %s236
      %p238 = pneg %p128
      %p239 = pneg %p125
      %p240 = pneg %p156
      %p241 = pneg %p153
      %p242 = scmp.lt.s32.totalorder %s19, 1
      %s243 = scalar_select %p242, %s19, 1
      %p244 = scmp.lt.s32.totalorder %s20, 0
      %s245 = scalar_select %p244, %s20, 0
      %s246 = sadd.s32 %s245, %s243
      %s247 = smul.addr %s246, 8
      %s248 = scalar_lea.vmem %s4, %s247
      %p249 = scmp.lt.s32.totalorder %s19, 1
      %s250 = scalar_select %p249, %s19, 1
      %p251 = scmp.lt.s32.totalorder %s20, 0
      %s252 = scalar_select %p251, %s20, 0
      %s253 = sadd.s32 %s252, %s250
      %s254 = smul.addr %s253, 8
      %s255 = scalar_lea.vmem %s0, %s254
      %p256 = scmp.lt.s32.totalorder %s19, 1
      %s257 = scalar_select %p256, %s19, 1
      %s258 = smul.addr %s257, 8
      %s259 = scalar_lea.vmem %s1, %s258
      %p260 = scmp.lt.s32.totalorder %s19, 1
      %s261 = scalar_select %p260, %s19, 1
      %s262 = smul.addr %s261, 8
      %s263 = scalar_lea.vmem %s2, %s262
      %p264 = scmp.lt.s32.totalorder %s20, 0
      %s265 = scalar_select %p264, %s20, 0
      %s266 = smul.addr %s265, 8
      %s267 = scalar_lea.vmem %s3, %s266
      %p268 = scmp.lt.s32.totalorder %s19, 1
      %s269 = scalar_select %p268, %s19, 1
      %p270 = scmp.lt.s32.totalorder %s20, 0
      %s271 = scalar_select %p270, %s20, 0
      %s272 = sadd.s32 %s271, %s269
      %s273 = smul.addr %s272, 8
      %s274 = scalar_lea.vmem %s4, %s273
      %v275 = vld [vmem:[%s255] sm:$0xff]
      %v276 = vld [vmem:[%s259] sm:$0xff]
      %v277 = vld [vmem:[%s263] sm:$0xff]
      %v278 = vld [vmem:[%s267] sm:$0xff]
      %vm279 = vcmask 130048
      %v281 = vsel %vm279, %v275, 0
      %v284 = vsel %vm279, %v276, 0
      %286 = vmatprep.subr.mxu0 0.0
      %287 = vmatpush1.xpose.msra.mxu0 0.0
      %288 = vmatprep.subr.mxu0 0.0
      %289 = vmatpush1.xpose.msra.mxu0 0.0
      %290 = vmatprep.subr.mxu0 0.0
      %291 = vmatpush1.xpose.msra.mxu0 0.0
      %292 = vmatprep.subr.mxu0 0.0
      %293 = vmatpush1.xpose.msra.mxu0 0.0
      %294 = vmatprep.subr.mxu0 0.0
      %295 = vmatpush1.xpose.msra.mxu0 0.0
      %296 = vmatprep.subr.mxu0 0.0
      %297 = vmatpush1.xpose.msra.mxu0 0.0
      %298 = vmatprep.subr.mxu0 0.0
      %299 = vmatpush1.xpose.msra.mxu0 0.0
      %300 = vmatprep.subr.mxu0 0.0
      %301 = vmatpush1.xpose.msra.mxu0 0.0
      %302 = vmatprep.subr.mxu0 0.0
      %303 = vmatpush1.xpose.msra.mxu0 0.0
      %304 = vmatprep.subr.mxu0 0.0
      %305 = vmatpush1.xpose.msra.mxu0 0.0
      %306 = vmatprep.subr.mxu0 0.0
      %307 = vmatpush1.xpose.msra.mxu0 0.0
      %308 = vmatprep.subr.mxu0 0.0
      %309 = vmatpush1.xpose.msra.mxu0 0.0
      %310 = vmatprep.subr.mxu0 0.0
      %311 = vmatpush1.xpose.msra.mxu0 0.0
      %312 = vmatprep.subr.mxu0 0.0
      %313 = vmatpush1.xpose.msra.mxu0 0.0
      %314 = vmatprep.subr.mxu0 0.0
      %315 = vmatpush1.xpose.msra.mxu0 0.0
      %316 = vmatprep.subr.mxu0 0.0
      %317 = vmatpush1.xpose.msra.mxu0 %v284
      %318 = vmatprep.subr.mxu0 0.0
      %319 = vmatpush2.xpose.msra.mxu0 0.0
      %320 = vmatprep.subr.mxu0 0.0
      %321 = vmatpush2.xpose.msra.mxu0 0.0
      %322 = vmatprep.subr.mxu0 0.0
      %323 = vmatpush2.xpose.msra.mxu0 0.0
      %324 = vmatprep.subr.mxu0 0.0
      %325 = vmatpush2.xpose.msra.mxu0 0.0
      %326 = vmatprep.subr.mxu0 0.0
      %327 = vmatpush2.xpose.msra.mxu0 0.0
      %328 = vmatprep.subr.mxu0 0.0
      %329 = vmatpush2.xpose.msra.mxu0 0.0
      %330 = vmatprep.subr.mxu0 0.0
      %331 = vmatpush2.xpose.msra.mxu0 0.0
      %332 = vmatprep.subr.mxu0 0.0
      %333 = vmatpush2.xpose.msra.mxu0 0.0
      %334 = vmatprep.subr.mxu0 0.0
      %335 = vmatpush2.xpose.msra.mxu0 0.0
      %336 = vmatprep.subr.mxu0 0.0
      %337 = vmatpush2.xpose.msra.mxu0 0.0
      %338 = vmatprep.subr.mxu0 0.0
      %339 = vmatpush2.xpose.msra.mxu0 0.0
      %340 = vmatprep.subr.mxu0 0.0
      %341 = vmatpush2.xpose.msra.mxu0 0.0
      %342 = vmatprep.subr.mxu0 0.0
      %343 = vmatpush2.xpose.msra.mxu0 0.0
      %344 = vmatprep.subr.mxu0 0.0
      %345 = vmatpush2.xpose.msra.mxu0 0.0
      %346 = vmatprep.subr.mxu0 0.0
      %347 = vmatpush2.xpose.msra.mxu0 0.0
      %348 = vmatprep.subr.mxu0 0.0
      %349 = vmatpush2.xpose.msra.mxu0 0.0
      %350 = vmatprep.mubr.f32.mxu0 0.0
      %351 = vmatmul.mubr.f32.gmra.mxu0 %v281
      %v352 = vpop.f32.mrf.mxu0
      %v353 = vadd.f32 0.0, %v352
      %v354 = vpop.f32.mrf.mxu0
      %355 = vdwg.mxu0
      %v356 = vmul.f32 %v353, 0.25
      %v357 = vadd.f32 %v356, %v278
      %vm358 = vcmask 64512
      %v359 = vsel %vm358, %v357, -inf
      %360 = vmax.xlane.f32.xlu0 %v359
      %v361 = vpop.xlane.xlu0 %360
      %v362 = vsub.f32 %v357, %v361
      %v363 = vmul.f32 %v362, 1.442695
      %v364 = vpow.pop %v363
      %v365 = vsel %vm358, %v364, 0.0
      %366 = vadd.xlane.f32.xlu0 %v365
      %v367 = vpop.xlane.xlu0 %366
      %v368 = vrcp.pop %v367
      %v369 = vmul.f32 %v364, %v368
      %v371 = vsel %vm358, %v369, 0
      %373 = vmatprep.subr.mxu0 0.0
      %374 = vmatpush1.msra.mxu0 0.0
      %375 = vmatprep.subr.mxu0 0.0
      %376 = vmatpush1.msra.mxu0 0.0
      %377 = vmatprep.subr.mxu0 0.0
      %378 = vmatpush1.msra.mxu0 0.0
      %379 = vmatprep.subr.mxu0 0.0
      %380 = vmatpush1.msra.mxu0 0.0
      %381 = vmatprep.subr.mxu0 0.0
      %382 = vmatpush1.msra.mxu0 0.0
      %383 = vmatprep.subr.mxu0 0.0
      %384 = vmatpush1.msra.mxu0 0.0
      %385 = vmatprep.subr.mxu0 0.0
      %386 = vmatpush1.msra.mxu0 0.0
      %387 = vmatprep.subr.mxu0 0.0
      %388 = vmatpush1.msra.mxu0 0.0
      %389 = vmatprep.subr.mxu0 0.0
      %390 = vmatpush1.msra.mxu0 0.0
      %391 = vmatprep.subr.mxu0 0.0
      %392 = vmatpush1.msra.mxu0 0.0
      %393 = vmatprep.subr.mxu0 0.0
      %394 = vmatpush1.msra.mxu0 0.0
      %395 = vmatprep.subr.mxu0 0.0
      %396 = vmatpush1.msra.mxu0 0.0
      %397 = vmatprep.subr.mxu0 0.0
      %398 = vmatpush1.msra.mxu0 0.0
      %399 = vmatprep.subr.mxu0 0.0
      %400 = vmatpush1.msra.mxu0 0.0
      %401 = vmatprep.subr.mxu0 0.0
      %402 = vmatpush1.msra.mxu0 0.0
      %403 = vmatprep.subr.mxu0 0.0
      %404 = vmatpush1.msra.mxu0 %v277
      %405 = vmatprep.subr.mxu0 0.0
      %406 = vmatpush2.msra.mxu0 0.0
      %407 = vmatprep.subr.mxu0 0.0
      %408 = vmatpush2.msra.mxu0 0.0
      %409 = vmatprep.subr.mxu0 0.0
      %410 = vmatpush2.msra.mxu0 0.0
      %411 = vmatprep.subr.mxu0 0.0
      %412 = vmatpush2.msra.mxu0 0.0
      %413 = vmatprep.subr.mxu0 0.0
      %414 = vmatpush2.msra.mxu0 0.0
      %415 = vmatprep.subr.mxu0 0.0
      %416 = vmatpush2.msra.mxu0 0.0
      %417 = vmatprep.subr.mxu0 0.0
      %418 = vmatpush2.msra.mxu0 0.0
      %419 = vmatprep.subr.mxu0 0.0
      %420 = vmatpush2.msra.mxu0 0.0
      %421 = vmatprep.subr.mxu0 0.0
      %422 = vmatpush2.msra.mxu0 0.0
      %423 = vmatprep.subr.mxu0 0.0
      %424 = vmatpush2.msra.mxu0 0.0
      %425 = vmatprep.subr.mxu0 0.0
      %426 = vmatpush2.msra.mxu0 0.0
      %427 = vmatprep.subr.mxu0 0.0
      %428 = vmatpush2.msra.mxu0 0.0
      %429 = vmatprep.subr.mxu0 0.0
      %430 = vmatpush2.msra.mxu0 0.0
      %431 = vmatprep.subr.mxu0 0.0
      %432 = vmatpush2.msra.mxu0 0.0
      %433 = vmatprep.subr.mxu0 0.0
      %434 = vmatpush2.msra.mxu0 0.0
      %435 = vmatprep.subr.mxu0 0.0
      %436 = vmatpush2.msra.mxu0 0.0
      %437 = vmatprep.mubr.f32.mxu0 0.0
      %438 = vmatmul.mubr.f32.gmra.mxu0 %v371
      %v439 = vpop.f32.mrf.mxu0
      %v440 = vadd.f32 0.0, %v439
      %v441 = vpop.f32.mrf.mxu0
      %442 = vdwg.mxu0
      %443 = vrot.lane.b32.xlu0 %v275, 112
      %v444 = vpop.permute.xlu0 %443
      %445 = vrot.lane.b32.xlu0 %v276, 112
      %v446 = vpop.permute.xlu0 %445
      %v447 = vsel %vm279, %v444, 0
      %v449 = vsel %vm279, %v446, 0
      %451 = vmatprep.subr.mxu0 0.0
      %452 = vmatpush1.xpose.msra.mxu0 0.0
      %453 = vmatprep.subr.mxu0 0.0
      %454 = vmatpush1.xpose.msra.mxu0 0.0
      %455 = vmatprep.subr.mxu0 0.0
      %456 = vmatpush1.xpose.msra.mxu0 0.0
      %457 = vmatprep.subr.mxu0 0.0
      %458 = vmatpush1.xpose.msra.mxu0 0.0
      %459 = vmatprep.subr.mxu0 0.0
      %460 = vmatpush1.xpose.msra.mxu0 0.0
      %461 = vmatprep.subr.mxu0 0.0
      %462 = vmatpush1.xpose.msra.mxu0 0.0
      %463 = vmatprep.subr.mxu0 0.0
      %464 = vmatpush1.xpose.msra.mxu0 0.0
      %465 = vmatprep.subr.mxu0 0.0
      %466 = vmatpush1.xpose.msra.mxu0 0.0
      %467 = vmatprep.subr.mxu0 0.0
      %468 = vmatpush1.xpose.msra.mxu0 0.0
      %469 = vmatprep.subr.mxu0 0.0
      %470 = vmatpush1.xpose.msra.mxu0 0.0
      %471 = vmatprep.subr.mxu0 0.0
      %472 = vmatpush1.xpose.msra.mxu0 0.0
      %473 = vmatprep.subr.mxu0 0.0
      %474 = vmatpush1.xpose.msra.mxu0 0.0
      %475 = vmatprep.subr.mxu0 0.0
      %476 = vmatpush1.xpose.msra.mxu0 0.0
      %477 = vmatprep.subr.mxu0 0.0
      %478 = vmatpush1.xpose.msra.mxu0 0.0
      %479 = vmatprep.subr.mxu0 0.0
      %480 = vmatpush1.xpose.msra.mxu0 0.0
      %481 = vmatprep.subr.mxu0 0.0
      %482 = vmatpush1.xpose.msra.mxu0 %v449
      %483 = vmatprep.subr.mxu0 0.0
      %484 = vmatpush2.xpose.msra.mxu0 0.0
      %485 = vmatprep.subr.mxu0 0.0
      %486 = vmatpush2.xpose.msra.mxu0 0.0
      %487 = vmatprep.subr.mxu0 0.0
      %488 = vmatpush2.xpose.msra.mxu0 0.0
      %489 = vmatprep.subr.mxu0 0.0
      %490 = vmatpush2.xpose.msra.mxu0 0.0
      %491 = vmatprep.subr.mxu0 0.0
      %492 = vmatpush2.xpose.msra.mxu0 0.0
      %493 = vmatprep.subr.mxu0 0.0
      %494 = vmatpush2.xpose.msra.mxu0 0.0
      %495 = vmatprep.subr.mxu0 0.0
      %496 = vmatpush2.xpose.msra.mxu0 0.0
      %497 = vmatprep.subr.mxu0 0.0
      %498 = vmatpush2.xpose.msra.mxu0 0.0
      %499 = vmatprep.subr.mxu0 0.0
      %500 = vmatpush2.xpose.msra.mxu0 0.0
      %501 = vmatprep.subr.mxu0 0.0
      %502 = vmatpush2.xpose.msra.mxu0 0.0
      %503 = vmatprep.subr.mxu0 0.0
      %504 = vmatpush2.xpose.msra.mxu0 0.0
      %505 = vmatprep.subr.mxu0 0.0
      %506 = vmatpush2.xpose.msra.mxu0 0.0
      %507 = vmatprep.subr.mxu0 0.0
      %508 = vmatpush2.xpose.msra.mxu0 0.0
      %509 = vmatprep.subr.mxu0 0.0
      %510 = vmatpush2.xpose.msra.mxu0 0.0
      %511 = vmatprep.subr.mxu0 0.0
      %512 = vmatpush2.xpose.msra.mxu0 0.0
      %513 = vmatprep.subr.mxu0 0.0
      %514 = vmatpush2.xpose.msra.mxu0 0.0
      %515 = vmatprep.mubr.f32.mxu0 0.0
      %516 = vmatmul.mubr.f32.gmra.mxu0 %v447
      %v517 = vpop.f32.mrf.mxu0
      %v518 = vadd.f32 0.0, %v517
      %v519 = vpop.f32.mrf.mxu0
      %520 = vdwg.mxu0
      %v521 = vmul.f32 %v518, 0.25
      %v522 = vadd.f32 %v521, %v278
      %v523 = vsel %vm358, %v522, -inf
      %524 = vmax.xlane.f32.xlu0 %v523
      %v525 = vpop.xlane.xlu0 %524
      %v526 = vsub.f32 %v522, %v525
      %v527 = vmul.f32 %v526, 1.442695
      %v528 = vpow.pop %v527
      %v529 = vsel %vm358, %v528, 0.0
      %530 = vadd.xlane.f32.xlu0 %v529
      %v531 = vpop.xlane.xlu0 %530
      %v532 = vrcp.pop %v531
      %v533 = vmul.f32 %v528, %v532
      %535 = vrot.lane.b32.xlu0 %v277, 112
      %v536 = vpop.permute.xlu0 %535
      %v539 = vsel %vm358, %v533, 0
      %541 = vmatprep.subr.mxu0 0.0
      %542 = vmatpush1.msra.mxu0 0.0
      %543 = vmatprep.subr.mxu0 0.0
      %544 = vmatpush1.msra.mxu0 0.0
      %545 = vmatprep.subr.mxu0 0.0
      %546 = vmatpush1.msra.mxu0 0.0
      %547 = vmatprep.subr.mxu0 0.0
      %548 = vmatpush1.msra.mxu0 0.0
      %549 = vmatprep.subr.mxu0 0.0
      %550 = vmatpush1.msra.mxu0 0.0
      %551 = vmatprep.subr.mxu0 0.0
      %552 = vmatpush1.msra.mxu0 0.0
      %553 = vmatprep.subr.mxu0 0.0
      %554 = vmatpush1.msra.mxu0 0.0
      %555 = vmatprep.subr.mxu0 0.0
      %556 = vmatpush1.msra.mxu0 0.0
      %557 = vmatprep.subr.mxu0 0.0
      %558 = vmatpush1.msra.mxu0 0.0
      %559 = vmatprep.subr.mxu0 0.0
      %560 = vmatpush1.msra.mxu0 0.0
      %561 = vmatprep.subr.mxu0 0.0
      %562 = vmatpush1.msra.mxu0 0.0
      %563 = vmatprep.subr.mxu0 0.0
      %564 = vmatpush1.msra.mxu0 0.0
      %565 = vmatprep.subr.mxu0 0.0
      %566 = vmatpush1.msra.mxu0 0.0
      %567 = vmatprep.subr.mxu0 0.0
      %568 = vmatpush1.msra.mxu0 0.0
      %569 = vmatprep.subr.mxu0 0.0
      %570 = vmatpush1.msra.mxu0 0.0
      %571 = vmatprep.subr.mxu0 0.0
      %572 = vmatpush1.msra.mxu0 %v536
      %573 = vmatprep.subr.mxu0 0.0
      %574 = vmatpush2.msra.mxu0 0.0
      %575 = vmatprep.subr.mxu0 0.0
      %576 = vmatpush2.msra.mxu0 0.0
      %577 = vmatprep.subr.mxu0 0.0
      %578 = vmatpush2.msra.mxu0 0.0
      %579 = vmatprep.subr.mxu0 0.0
      %580 = vmatpush2.msra.mxu0 0.0
      %581 = vmatprep.subr.mxu0 0.0
      %582 = vmatpush2.msra.mxu0 0.0
      %583 = vmatprep.subr.mxu0 0.0
      %584 = vmatpush2.msra.mxu0 0.0
      %585 = vmatprep.subr.mxu0 0.0
      %586 = vmatpush2.msra.mxu0 0.0
      %587 = vmatprep.subr.mxu0 0.0
      %588 = vmatpush2.msra.mxu0 0.0
      %589 = vmatprep.subr.mxu0 0.0
      %590 = vmatpush2.msra.mxu0 0.0
      %591 = vmatprep.subr.mxu0 0.0
      %592 = vmatpush2.msra.mxu0 0.0
      %593 = vmatprep.subr.mxu0 0.0
      %594 = vmatpush2.msra.mxu0 0.0
      %595 = vmatprep.subr.mxu0 0.0
      %596 = vmatpush2.msra.mxu0 0.0
      %597 = vmatprep.subr.mxu0 0.0
      %598 = vmatpush2.msra.mxu0 0.0
      %599 = vmatprep.subr.mxu0 0.0
      %600 = vmatpush2.msra.mxu0 0.0
      %601 = vmatprep.subr.mxu0 0.0
      %602 = vmatpush2.msra.mxu0 0.0
      %603 = vmatprep.subr.mxu0 0.0
      %604 = vmatpush2.msra.mxu0 0.0
      %605 = vmatprep.mubr.f32.mxu0 0.0
      %606 = vmatmul.mubr.f32.gmra.mxu0 %v539
      %v607 = vpop.f32.mrf.mxu0
      %v608 = vadd.f32 0.0, %v607
      %v609 = vpop.f32.mrf.mxu0
      %610 = vdwg.mxu0
      %611 = vrot.lane.b32.xlu0 %v275, 96
      %v612 = vpop.permute.xlu0 %611
      %613 = vrot.lane.b32.xlu0 %v276, 96
      %v614 = vpop.permute.xlu0 %613
      %v615 = vsel %vm279, %v612, 0
      %v617 = vsel %vm279, %v614, 0
      %619 = vmatprep.subr.mxu0 0.0
      %620 = vmatpush1.xpose.msra.mxu0 0.0
      %621 = vmatprep.subr.mxu0 0.0
      %622 = vmatpush1.xpose.msra.mxu0 0.0
      %623 = vmatprep.subr.mxu0 0.0
      %624 = vmatpush1.xpose.msra.mxu0 0.0
      %625 = vmatprep.subr.mxu0 0.0
      %626 = vmatpush1.xpose.msra.mxu0 0.0
      %627 = vmatprep.subr.mxu0 0.0
      %628 = vmatpush1.xpose.msra.mxu0 0.0
      %629 = vmatprep.subr.mxu0 0.0
      %630 = vmatpush1.xpose.msra.mxu0 0.0
      %631 = vmatprep.subr.mxu0 0.0
      %632 = vmatpush1.xpose.msra.mxu0 0.0
      %633 = vmatprep.subr.mxu0 0.0
      %634 = vmatpush1.xpose.msra.mxu0 0.0
      %635 = vmatprep.subr.mxu0 0.0
      %636 = vmatpush1.xpose.msra.mxu0 0.0
      %637 = vmatprep.subr.mxu0 0.0
      %638 = vmatpush1.xpose.msra.mxu0 0.0
      %639 = vmatprep.subr.mxu0 0.0
      %640 = vmatpush1.xpose.msra.mxu0 0.0
      %641 = vmatprep.subr.mxu0 0.0
      %642 = vmatpush1.xpose.msra.mxu0 0.0
      %643 = vmatprep.subr.mxu0 0.0
      %644 = vmatpush1.xpose.msra.mxu0 0.0
      %645 = vmatprep.subr.mxu0 0.0
      %646 = vmatpush1.xpose.msra.mxu0 0.0
      %647 = vmatprep.subr.mxu0 0.0
      %648 = vmatpush1.xpose.msra.mxu0 0.0
      %649 = vmatprep.subr.mxu0 0.0
      %650 = vmatpush1.xpose.msra.mxu0 %v617
      %651 = vmatprep.subr.mxu0 0.0
      %652 = vmatpush2.xpose.msra.mxu0 0.0
      %653 = vmatprep.subr.mxu0 0.0
      %654 = vmatpush2.xpose.msra.mxu0 0.0
      %655 = vmatprep.subr.mxu0 0.0
      %656 = vmatpush2.xpose.msra.mxu0 0.0
      %657 = vmatprep.subr.mxu0 0.0
      %658 = vmatpush2.xpose.msra.mxu0 0.0
      %659 = vmatprep.subr.mxu0 0.0
      %660 = vmatpush2.xpose.msra.mxu0 0.0
      %661 = vmatprep.subr.mxu0 0.0
      %662 = vmatpush2.xpose.msra.mxu0 0.0
      %663 = vmatprep.subr.mxu0 0.0
      %664 = vmatpush2.xpose.msra.mxu0 0.0
      %665 = vmatprep.subr.mxu0 0.0
      %666 = vmatpush2.xpose.msra.mxu0 0.0
      %667 = vmatprep.subr.mxu0 0.0
      %668 = vmatpush2.xpose.msra.mxu0 0.0
      %669 = vmatprep.subr.mxu0 0.0
      %670 = vmatpush2.xpose.msra.mxu0 0.0
      %671 = vmatprep.subr.mxu0 0.0
      %672 = vmatpush2.xpose.msra.mxu0 0.0
      %673 = vmatprep.subr.mxu0 0.0
      %674 = vmatpush2.xpose.msra.mxu0 0.0
      %675 = vmatprep.subr.mxu0 0.0
      %676 = vmatpush2.xpose.msra.mxu0 0.0
      %677 = vmatprep.subr.mxu0 0.0
      %678 = vmatpush2.xpose.msra.mxu0 0.0
      %679 = vmatprep.subr.mxu0 0.0
      %680 = vmatpush2.xpose.msra.mxu0 0.0
      %681 = vmatprep.subr.mxu0 0.0
      %682 = vmatpush2.xpose.msra.mxu0 0.0
      %683 = vmatprep.mubr.f32.mxu0 0.0
      %684 = vmatmul.mubr.f32.gmra.mxu0 %v615
      %v685 = vpop.f32.mrf.mxu0
      %v686 = vadd.f32 0.0, %v685
      %v687 = vpop.f32.mrf.mxu0
      %688 = vdwg.mxu0
      %v689 = vmul.f32 %v686, 0.25
      %v690 = vadd.f32 %v689, %v278
      %v691 = vsel %vm358, %v690, -inf
      %692 = vmax.xlane.f32.xlu0 %v691
      %v693 = vpop.xlane.xlu0 %692
      %v694 = vsub.f32 %v690, %v693
      %v695 = vmul.f32 %v694, 1.442695
      %v696 = vpow.pop %v695
      %v697 = vsel %vm358, %v696, 0.0
      %698 = vadd.xlane.f32.xlu0 %v697
      %v699 = vpop.xlane.xlu0 %698
      %v700 = vrcp.pop %v699
      %v701 = vmul.f32 %v696, %v700
      %702 = vrot.lane.b32.xlu0 %v277, 96
      %v703 = vpop.permute.xlu0 %702
      %v706 = vsel %vm358, %v701, 0
      %708 = vmatprep.subr.mxu0 0.0
      %709 = vmatpush1.msra.mxu0 0.0
      %710 = vmatprep.subr.mxu0 0.0
      %711 = vmatpush1.msra.mxu0 0.0
      %712 = vmatprep.subr.mxu0 0.0
      %713 = vmatpush1.msra.mxu0 0.0
      %714 = vmatprep.subr.mxu0 0.0
      %715 = vmatpush1.msra.mxu0 0.0
      %716 = vmatprep.subr.mxu0 0.0
      %717 = vmatpush1.msra.mxu0 0.0
      %718 = vmatprep.subr.mxu0 0.0
      %719 = vmatpush1.msra.mxu0 0.0
      %720 = vmatprep.subr.mxu0 0.0
      %721 = vmatpush1.msra.mxu0 0.0
      %722 = vmatprep.subr.mxu0 0.0
      %723 = vmatpush1.msra.mxu0 0.0
      %724 = vmatprep.subr.mxu0 0.0
      %725 = vmatpush1.msra.mxu0 0.0
      %726 = vmatprep.subr.mxu0 0.0
      %727 = vmatpush1.msra.mxu0 0.0
      %728 = vmatprep.subr.mxu0 0.0
      %729 = vmatpush1.msra.mxu0 0.0
      %730 = vmatprep.subr.mxu0 0.0
      %731 = vmatpush1.msra.mxu0 0.0
      %732 = vmatprep.subr.mxu0 0.0
      %733 = vmatpush1.msra.mxu0 0.0
      %734 = vmatprep.subr.mxu0 0.0
      %735 = vmatpush1.msra.mxu0 0.0
      %736 = vmatprep.subr.mxu0 0.0
      %737 = vmatpush1.msra.mxu0 0.0
      %738 = vmatprep.subr.mxu0 0.0
      %739 = vmatpush1.msra.mxu0 %v703
      %740 = vmatprep.subr.mxu0 0.0
      %741 = vmatpush2.msra.mxu0 0.0
      %742 = vmatprep.subr.mxu0 0.0
      %743 = vmatpush2.msra.mxu0 0.0
      %744 = vmatprep.subr.mxu0 0.0
      %745 = vmatpush2.msra.mxu0 0.0
      %746 = vmatprep.subr.mxu0 0.0
      %747 = vmatpush2.msra.mxu0 0.0
      %748 = vmatprep.subr.mxu0 0.0
      %749 = vmatpush2.msra.mxu0 0.0
      %750 = vmatprep.subr.mxu0 0.0
      %751 = vmatpush2.msra.mxu0 0.0
      %752 = vmatprep.subr.mxu0 0.0
      %753 = vmatpush2.msra.mxu0 0.0
      %754 = vmatprep.subr.mxu0 0.0
      %755 = vmatpush2.msra.mxu0 0.0
      %756 = vmatprep.subr.mxu0 0.0
      %757 = vmatpush2.msra.mxu0 0.0
      %758 = vmatprep.subr.mxu0 0.0
      %759 = vmatpush2.msra.mxu0 0.0
      %760 = vmatprep.subr.mxu0 0.0
      %761 = vmatpush2.msra.mxu0 0.0
      %762 = vmatprep.subr.mxu0 0.0
      %763 = vmatpush2.msra.mxu0 0.0
      %764 = vmatprep.subr.mxu0 0.0
      %765 = vmatpush2.msra.mxu0 0.0
      %766 = vmatprep.subr.mxu0 0.0
      %767 = vmatpush2.msra.mxu0 0.0
      %768 = vmatprep.subr.mxu0 0.0
      %769 = vmatpush2.msra.mxu0 0.0
      %770 = vmatprep.subr.mxu0 0.0
      %771 = vmatpush2.msra.mxu0 0.0
      %772 = vmatprep.mubr.f32.mxu0 0.0
      %773 = vmatmul.mubr.f32.gmra.mxu0 %v706
      %v774 = vpop.f32.mrf.mxu0
      %v775 = vadd.f32 0.0, %v774
      %v776 = vpop.f32.mrf.mxu0
      %777 = vdwg.mxu0
      %778 = vrot.lane.b32.xlu0 %v275, 80
      %v779 = vpop.permute.xlu0 %778
      %780 = vrot.lane.b32.xlu0 %v276, 80
      %v781 = vpop.permute.xlu0 %780
      %v782 = vsel %vm279, %v779, 0
      %v784 = vsel %vm279, %v781, 0
      %786 = vmatprep.subr.mxu0 0.0
      %787 = vmatpush1.xpose.msra.mxu0 0.0
      %788 = vmatprep.subr.mxu0 0.0
      %789 = vmatpush1.xpose.msra.mxu0 0.0
      %790 = vmatprep.subr.mxu0 0.0
      %791 = vmatpush1.xpose.msra.mxu0 0.0
      %792 = vmatprep.subr.mxu0 0.0
      %793 = vmatpush1.xpose.msra.mxu0 0.0
      %794 = vmatprep.subr.mxu0 0.0
      %795 = vmatpush1.xpose.msra.mxu0 0.0
      %796 = vmatprep.subr.mxu0 0.0
      %797 = vmatpush1.xpose.msra.mxu0 0.0
      %798 = vmatprep.subr.mxu0 0.0
      %799 = vmatpush1.xpose.msra.mxu0 0.0
      %800 = vmatprep.subr.mxu0 0.0
      %801 = vmatpush1.xpose.msra.mxu0 0.0
      %802 = vmatprep.subr.mxu0 0.0
      %803 = vmatpush1.xpose.msra.mxu0 0.0
      %804 = vmatprep.subr.mxu0 0.0
      %805 = vmatpush1.xpose.msra.mxu0 0.0
      %806 = vmatprep.subr.mxu0 0.0
      %807 = vmatpush1.xpose.msra.mxu0 0.0
      %808 = vmatprep.subr.mxu0 0.0
      %809 = vmatpush1.xpose.msra.mxu0 0.0
      %810 = vmatprep.subr.mxu0 0.0
      %811 = vmatpush1.xpose.msra.mxu0 0.0
      %812 = vmatprep.subr.mxu0 0.0
      %813 = vmatpush1.xpose.msra.mxu0 0.0
      %814 = vmatprep.subr.mxu0 0.0
      %815 = vmatpush1.xpose.msra.mxu0 0.0
      %816 = vmatprep.subr.mxu0 0.0
      %817 = vmatpush1.xpose.msra.mxu0 %v784
      %818 = vmatprep.subr.mxu0 0.0
      %819 = vmatpush2.xpose.msra.mxu0 0.0
      %820 = vmatprep.subr.mxu0 0.0
      %821 = vmatpush2.xpose.msra.mxu0 0.0
      %822 = vmatprep.subr.mxu0 0.0
      %823 = vmatpush2.xpose.msra.mxu0 0.0
      %824 = vmatprep.subr.mxu0 0.0
      %825 = vmatpush2.xpose.msra.mxu0 0.0
      %826 = vmatprep.subr.mxu0 0.0
      %827 = vmatpush2.xpose.msra.mxu0 0.0
      %828 = vmatprep.subr.mxu0 0.0
      %829 = vmatpush2.xpose.msra.mxu0 0.0
      %830 = vmatprep.subr.mxu0 0.0
      %831 = vmatpush2.xpose.msra.mxu0 0.0
      %832 = vmatprep.subr.mxu0 0.0
      %833 = vmatpush2.xpose.msra.mxu0 0.0
      %834 = vmatprep.subr.mxu0 0.0
      %835 = vmatpush2.xpose.msra.mxu0 0.0
      %836 = vmatprep.subr.mxu0 0.0
      %837 = vmatpush2.xpose.msra.mxu0 0.0
      %838 = vmatprep.subr.mxu0 0.0
      %839 = vmatpush2.xpose.msra.mxu0 0.0
      %840 = vmatprep.subr.mxu0 0.0
      %841 = vmatpush2.xpose.msra.mxu0 0.0
      %842 = vmatprep.subr.mxu0 0.0
      %843 = vmatpush2.xpose.msra.mxu0 0.0
      %844 = vmatprep.subr.mxu0 0.0
      %845 = vmatpush2.xpose.msra.mxu0 0.0
      %846 = vmatprep.subr.mxu0 0.0
      %847 = vmatpush2.xpose.msra.mxu0 0.0
      %848 = vmatprep.subr.mxu0 0.0
      %849 = vmatpush2.xpose.msra.mxu0 0.0
      %850 = vmatprep.mubr.f32.mxu0 0.0
      %851 = vmatmul.mubr.f32.gmra.mxu0 %v782
      %v852 = vpop.f32.mrf.mxu0
      %v853 = vadd.f32 0.0, %v852
      %v854 = vpop.f32.mrf.mxu0
      %855 = vdwg.mxu0
      %v856 = vmul.f32 %v853, 0.25
      %v857 = vadd.f32 %v856, %v278
      %v858 = vsel %vm358, %v857, -inf
      %859 = vmax.xlane.f32.xlu0 %v858
      %v860 = vpop.xlane.xlu0 %859
      %v861 = vsub.f32 %v857, %v860
      %v862 = vmul.f32 %v861, 1.442695
      %v863 = vpow.pop %v862
      %v864 = vsel %vm358, %v863, 0.0
      %865 = vadd.xlane.f32.xlu0 %v864
      %v866 = vpop.xlane.xlu0 %865
      %v867 = vrcp.pop %v866
      %v868 = vmul.f32 %v863, %v867
      %869 = vrot.lane.b32.xlu0 %v277, 80
      %v870 = vpop.permute.xlu0 %869
      %v873 = vsel %vm358, %v868, 0
      %875 = vmatprep.subr.mxu0 0.0
      %876 = vmatpush1.msra.mxu0 0.0
      %877 = vmatprep.subr.mxu0 0.0
      %878 = vmatpush1.msra.mxu0 0.0
      %879 = vmatprep.subr.mxu0 0.0
      %880 = vmatpush1.msra.mxu0 0.0
      %881 = vmatprep.subr.mxu0 0.0
      %882 = vmatpush1.msra.mxu0 0.0
      %883 = vmatprep.subr.mxu0 0.0
      %884 = vmatpush1.msra.mxu0 0.0
      %885 = vmatprep.subr.mxu0 0.0
      %886 = vmatpush1.msra.mxu0 0.0
      %887 = vmatprep.subr.mxu0 0.0
      %888 = vmatpush1.msra.mxu0 0.0
      %889 = vmatprep.subr.mxu0 0.0
      %890 = vmatpush1.msra.mxu0 0.0
      %891 = vmatprep.subr.mxu0 0.0
      %892 = vmatpush1.msra.mxu0 0.0
      %893 = vmatprep.subr.mxu0 0.0
      %894 = vmatpush1.msra.mxu0 0.0
      %895 = vmatprep.subr.mxu0 0.0
      %896 = vmatpush1.msra.mxu0 0.0
      %897 = vmatprep.subr.mxu0 0.0
      %898 = vmatpush1.msra.mxu0 0.0
      %899 = vmatprep.subr.mxu0 0.0
      %900 = vmatpush1.msra.mxu0 0.0
      %901 = vmatprep.subr.mxu0 0.0
      %902 = vmatpush1.msra.mxu0 0.0
      %903 = vmatprep.subr.mxu0 0.0
      %904 = vmatpush1.msra.mxu0 0.0
      %905 = vmatprep.subr.mxu0 0.0
      %906 = vmatpush1.msra.mxu0 %v870
      %907 = vmatprep.subr.mxu0 0.0
      %908 = vmatpush2.msra.mxu0 0.0
      %909 = vmatprep.subr.mxu0 0.0
      %910 = vmatpush2.msra.mxu0 0.0
      %911 = vmatprep.subr.mxu0 0.0
      %912 = vmatpush2.msra.mxu0 0.0
      %913 = vmatprep.subr.mxu0 0.0
      %914 = vmatpush2.msra.mxu0 0.0
      %915 = vmatprep.subr.mxu0 0.0
      %916 = vmatpush2.msra.mxu0 0.0
      %917 = vmatprep.subr.mxu0 0.0
      %918 = vmatpush2.msra.mxu0 0.0
      %919 = vmatprep.subr.mxu0 0.0
      %920 = vmatpush2.msra.mxu0 0.0
      %921 = vmatprep.subr.mxu0 0.0
      %922 = vmatpush2.msra.mxu0 0.0
      %923 = vmatprep.subr.mxu0 0.0
      %924 = vmatpush2.msra.mxu0 0.0
      %925 = vmatprep.subr.mxu0 0.0
      %926 = vmatpush2.msra.mxu0 0.0
      %927 = vmatprep.subr.mxu0 0.0
      %928 = vmatpush2.msra.mxu0 0.0
      %929 = vmatprep.subr.mxu0 0.0
      %930 = vmatpush2.msra.mxu0 0.0
      %931 = vmatprep.subr.mxu0 0.0
      %932 = vmatpush2.msra.mxu0 0.0
      %933 = vmatprep.subr.mxu0 0.0
      %934 = vmatpush2.msra.mxu0 0.0
      %935 = vmatprep.subr.mxu0 0.0
      %936 = vmatpush2.msra.mxu0 0.0
      %937 = vmatprep.subr.mxu0 0.0
      %938 = vmatpush2.msra.mxu0 0.0
      %939 = vmatprep.mubr.f32.mxu0 0.0
      %940 = vmatmul.mubr.f32.gmra.mxu0 %v873
      %v941 = vpop.f32.mrf.mxu0
      %v942 = vadd.f32 0.0, %v941
      %v943 = vpop.f32.mrf.mxu0
      %944 = vdwg.mxu0
      %946 = vrot.lane.b32.xlu0 %v608, 16
      %v947 = vpop.permute.xlu0 %946
      %950 = vrot.lane.b32.xlu0 %v775, 32
      %v951 = vpop.permute.xlu0 %950
      %954 = vrot.lane.b32.xlu0 %v942, 48
      %v955 = vpop.permute.xlu0 %954
      %v957 = vsel %vm279, %v440, %v947
      %vm958 = vcmask 261120
      %v959 = vsel %vm958, %v957, %v951
      %vm960 = vcmask 392192
      %v961 = vsel %vm960, %v959, %v955
      %vm962 = vcmask 523264
      %963 = vst.msk [vmem:[%s274] sm:$0xff] %vm962, %v961
      %p964 = scmp.lt.s32.totalorder %s19, 1
      %s965 = scalar_select %p964, %s19, 1
      %p966 = scmp.lt.s32.totalorder %s20, 0
      %s967 = scalar_select %p966, %s20, 0
      %s968 = sadd.s32 %s967, %s965
      %s969 = smul.addr %s968, 8
      %s970 = scalar_lea.vmem %s4, %s969
      // Predicated region
      $region37: #{decoder_layer.9} parent=35 // pred_check
        %p971 = pneg %p153
      $region38: #{decoder_layer.9} parent=35 // pred_check_branch
        %973 = sbr.rel (%p971) target = $region40
      $region39: #{decoder_layer.9} parent=35 // pred_region
        _
      $region40: #{decoder_layer.9} parent=35 // pred_fallthru
        _
    $region36: #{decoder_layer.9} parent=5 // pred_fallthru
      _
    %p974 = scmp.le.s32.totalorder 2, %s10
    // Predicated region
    $region41: #{decoder_layer.9} parent=5 // pred_check
      %p975 = pneg %p974
    $region42: #{decoder_layer.9} parent=5 // pred_check_branch
      %977 = sbr.rel (%p975) target = $region44
    $region43: #{decoder_layer.9} parent=5 // pred_region
      %s978 = ssub.s32 %s10, 2
      // Predicated region
      $region45: #{decoder_layer.9} parent=43 // pred_check
        %p979 = pneg %p159
      $region46: #{decoder_layer.9} parent=43 // pred_check_branch
        %981 = sbr.rel (%p979) target = $region48
      $region47: #{decoder_layer.9} parent=43 // pred_region
        %p982 = scmp.lt.s32.totalorder %s21, 1
        %s983 = scalar_select %p982, %s21, 1
        %p984 = scmp.lt.s32.totalorder %s22, 0
        %s985 = scalar_select %p984, %s22, 0
        %s986 = sadd.s32 %s985, %s983
        %s987 = smul.addr %s986, 8
        %s988 = scalar_lea.vmem %s4, %s987
      $region48: #{decoder_layer.9} parent=43 // pred_fallthru
        _
    $region44: #{decoder_layer.9} parent=5 // pred_fallthru
      _
  $region6: #{decoder_layer.9} parent=0 // loop_footer
    %s14 = sadd.s32 1, %s10
  $region7: #{decoder_layer.9} parent=0 // loop_footer_branch
    %9 = sbr.rel target = $region3
  $region8: #{decoder_layer.9} parent=0 // loop_exit
    _

// kernel: decoder_layer.10
$region0: #{decoder_layer.10}
  #allocation0 [shape = 'u32[]', space=smem, size = 0x4, offset = 0x4, fixed_abs, tag = 'smem constant byte address 0x4 - core index']
  #allocation1 [shape = 'u32[144,128]{1,0:T(1,128)}', space=vmem, size = 0x12000, scoped, tag = 'internal scratch']
  %s0 = inlined_call_operand.vmem [shape: f32[16,64], index: 0, kind: input, shape index: {}]
  %s1 = inlined_call_operand.vmem [shape: f32[64,64], index: 1, kind: input, shape index: {}]
  %s2 = inlined_call_operand.vmem [shape: f32[1,64], index: 2, kind: input, shape index: {}]
  %s3 = inlined_call_operand.vmem [shape: f32[16,64], index: 3, kind: input, shape index: {}]
  %s4 = inlined_call_operand.vmem [shape: f32[1,64], index: 4, kind: input, shape index: {}]
  %s5 = inlined_call_operand.vmem [shape: f32[1,64], index: 5, kind: input, shape index: {}]
  %s6 = inlined_call_operand.vmem [shape: f32[16,64], index: 6, kind: output, shape index: {}]
  %s7 = sld [smem:[#allocation0]]
  $region34: #{decoder_layer.10} parent=0
    _
  %s9 = ssub.s32 1, %s7
  %s10 = scalar_select 0, %s9, %s7
  // Predicated region
  $region2: #{decoder_layer.10} parent=0 // pred_check
    _
  $region3: #{decoder_layer.10} parent=0 // pred_check_branch
    %12 = sbr.rel (0) target = $region5
  $region4: #{decoder_layer.10} parent=0 // pred_region
    _
  $region5: #{decoder_layer.10} parent=0 // pred_fallthru
    _
  // Predicated region
  $region6: #{decoder_layer.10} parent=0 // pred_check
    _
  $region7: #{decoder_layer.10} parent=0 // pred_check_branch
    %14 = sbr.rel (0) target = $region9
  $region8: #{decoder_layer.10} parent=0 // pred_region
    _
  $region9: #{decoder_layer.10} parent=0 // pred_fallthru
    _
  // Predicated region
  $region10: #{decoder_layer.10} parent=0 // pred_check
    _
  $region11: #{decoder_layer.10} parent=0 // pred_check_branch
    %16 = sbr.rel (0) target = $region13
  $region12: #{decoder_layer.10} parent=0 // pred_region
    _
  $region13: #{decoder_layer.10} parent=0 // pred_fallthru
    _
  // Predicated region
  $region14: #{decoder_layer.10} parent=0 // pred_check
    _
  $region15: #{decoder_layer.10} parent=0 // pred_check_branch
    %18 = sbr.rel (0) target = $region17
  $region16: #{decoder_layer.10} parent=0 // pred_region
    _
  $region17: #{decoder_layer.10} parent=0 // pred_fallthru
    _
  // Predicated region
  $region18: #{decoder_layer.10} parent=0 // pred_check
    _
  $region19: #{decoder_layer.10} parent=0 // pred_check_branch
    %20 = sbr.rel (0) target = $region21
  $region20: #{decoder_layer.10} parent=0 // pred_region
    _
  $region21: #{decoder_layer.10} parent=0 // pred_fallthru
    _
  // Predicated region
  $region22: #{decoder_layer.10} parent=0 // pred_check
    _
  $region23: #{decoder_layer.10} parent=0 // pred_check_branch
    %22 = sbr.rel (0) target = $region25
  $region24: #{decoder_layer.10} parent=0 // pred_region
    _
  $region25: #{decoder_layer.10} parent=0 // pred_fallthru
    _
  %v23 = vld [vmem:[%s0] sm:$0xff]
  %v24 = vld [vmem:[%s0 + $0x8] sm:$0xff]
  %v25 = vld [vmem:[%s1] sm:$0xff]
  %v26 = vld [vmem:[%s1 + $0x8] sm:$0xff]
  %v27 = vld [vmem:[%s1 + $0x10] sm:$0xff]
  %v28 = vld [vmem:[%s1 + $0x18] sm:$0xff]
  %v29 = vld [vmem:[%s1 + $0x20] sm:$0xff]
  %v30 = vld [vmem:[%s1 + $0x28] sm:$0xff]
  %v31 = vld [vmem:[%s1 + $0x30] sm:$0xff]
  %v32 = vld [vmem:[%s1 + $0x38] sm:$0xff]
  %v33 = vld [vmem:[%s2] sm:$0x1]
  %v35 = vlaneseq
  %v36 = vshrl.u32 %v35, 7
  %v37 = vsub.s32 0, %v36
  %v38 = vrot.slane %v33, %v37
  %vm40 = vcmask 523264
  %v42 = vsel %vm40, %v23, 0
  %v45 = vsel %vm40, %v24, 0
  %47 = vmatprep.subr.mxu0 0.0
  %48 = vmatpush1.msra.mxu0 0.0
  %49 = vmatprep.subr.mxu0 0.0
  %50 = vmatpush1.msra.mxu0 0.0
  %51 = vmatprep.subr.mxu0 0.0
  %52 = vmatpush1.msra.mxu0 0.0
  %53 = vmatprep.subr.mxu0 0.0
  %54 = vmatpush1.msra.mxu0 0.0
  %55 = vmatprep.subr.mxu0 0.0
  %56 = vmatpush1.msra.mxu0 0.0
  %57 = vmatprep.subr.mxu0 0.0
  %58 = vmatpush1.msra.mxu0 0.0
  %59 = vmatprep.subr.mxu0 0.0
  %60 = vmatpush1.msra.mxu0 0.0
  %61 = vmatprep.subr.mxu0 0.0
  %62 = vmatpush1.msra.mxu0 0.0
  %63 = vmatprep.subr.mxu0 0.0
  %64 = vmatpush1.msra.mxu0 %v32
  %65 = vmatprep.subr.mxu0 0.0
  %66 = vmatpush1.msra.mxu0 %v31
  %67 = vmatprep.subr.mxu0 0.0
  %68 = vmatpush1.msra.mxu0 %v30
  %69 = vmatprep.subr.mxu0 0.0
  %70 = vmatpush1.msra.mxu0 %v29
  %71 = vmatprep.subr.mxu0 0.0
  %72 = vmatpush1.msra.mxu0 %v28
  %73 = vmatprep.subr.mxu0 0.0
  %74 = vmatpush1.msra.mxu0 %v27
  %75 = vmatprep.subr.mxu0 0.0
  %76 = vmatpush1.msra.mxu0 %v26
  %77 = vmatprep.subr.mxu0 0.0
  %78 = vmatpush1.msra.mxu0 %v25
  %79 = vmatprep.subr.mxu0 0.0
  %80 = vmatpush2.msra.mxu0 0.0
  %81 = vmatprep.subr.mxu0 0.0
  %82 = vmatpush2.msra.mxu0 0.0
  %83 = vmatprep.subr.mxu0 0.0
  %84 = vmatpush2.msra.mxu0 0.0
  %85 = vmatprep.subr.mxu0 0.0
  %86 = vmatpush2.msra.mxu0 0.0
  %87 = vmatprep.subr.mxu0 0.0
  %88 = vmatpush2.msra.mxu0 0.0
  %89 = vmatprep.subr.mxu0 0.0
  %90 = vmatpush2.msra.mxu0 0.0
  %91 = vmatprep.subr.mxu0 0.0
  %92 = vmatpush2.msra.mxu0 0.0
  %93 = vmatprep.subr.mxu0 0.0
  %94 = vmatpush2.msra.mxu0 0.0
  %95 = vmatprep.subr.mxu0 0.0
  %96 = vmatpush2.msra.mxu0 0.0
  %97 = vmatprep.subr.mxu0 0.0
  %98 = vmatpush2.msra.mxu0 0.0
  %99 = vmatprep.subr.mxu0 0.0
  %100 = vmatpush2.msra.mxu0 0.0
  %101 = vmatprep.subr.mxu0 0.0
  %102 = vmatpush2.msra.mxu0 0.0
  %103 = vmatprep.subr.mxu0 0.0
  %104 = vmatpush2.msra.mxu0 0.0
  %105 = vmatprep.subr.mxu0 0.0
  %106 = vmatpush2.msra.mxu0 0.0
  %107 = vmatprep.subr.mxu0 0.0
  %108 = vmatpush2.msra.mxu0 0.0
  %109 = vmatprep.subr.mxu0 0.0
  %110 = vmatpush2.msra.mxu0 0.0
  %111 = vmatprep.mubr.f32.mxu0 0.0
  %112 = vmatmul.mubr.f32.gmra.mxu0 %v42
  %v113 = vpop.f32.mrf.mxu0
  %v114 = vadd.f32 %v38, %v113
  %v115 = vpop.f32.mrf.mxu0
  %116 = vmatprep.mubr.f32.mxu0 0.0
  %117 = vmatmul.mubr.f32.gmra.mxu0 %v45
  %v118 = vpop.f32.mrf.mxu0
  %v119 = vadd.f32 %v38, %v118
  %v120 = vpop.f32.mrf.mxu0
  %121 = vdwg.mxu0
  %v122 = vld [vmem:[%s3] sm:$0xff]
  %v123 = vld [vmem:[%s3 + $0x8] sm:$0xff]
  %v124 = vadd.f32 %v114, %v122
  %v125 = vadd.f32 %v119, %v123
  %v126 = vsel %vm40, %v124, 0.0
  %127 = vadd.xlane.f32.xlu0 %v126
  %v128 = vpop.xlane.xlu0 %127
  %v129 = vsel %vm40, %v125, 0.0
  %130 = vadd.xlane.f32.xlu0 %v129
  %v131 = vpop.xlane.xlu0 %130
  %v132 = vrcp.pop 64.0
  %v133 = vmul.f32 %v128, %v132
  %v134 = vmul.f32 %v131, %v132
  %v135 = vsub.f32 %v124, %v133
  %v136 = vsub.f32 %v125, %v134
  %v137 = vmul.f32 %v135, %v135
  %v138 = vmul.f32 %v136, %v136
  %v139 = vsel %vm40, %v137, 0.0
  %140 = vadd.xlane.f32.xlu0 %v139
  %v141 = vpop.xlane.xlu0 %140
  %v142 = vsel %vm40, %v138, 0.0
  %143 = vadd.xlane.f32.xlu0 %v142
  %v144 = vpop.xlane.xlu0 %143
  %v145 = vmul.f32 %v141, %v132
  %v146 = vmul.f32 %v144, %v132
  %v147 = vadd.f32 %v145, 1e-05
  %v148 = vadd.f32 %v146, 1e-05
  %v149 = vrsqrt.pop %v147
  %v150 = vrsqrt.pop %v148
  %v151 = vmul.f32 %v135, %v149
  %v152 = vmul.f32 %v136, %v150
  %v153 = vld [vmem:[%s4] sm:$0x1]
  %v155 = vlaneseq
  %v156 = vshrl.u32 %v155, 7
  %v157 = vsub.s32 0, %v156
  %v158 = vrot.slane %v153, %v157
  %v160 = vmul.f32 %v151, %v158
  %v161 = vmul.f32 %v152, %v158
  %v162 = vld [vmem:[%s5] sm:$0x1]
  %v164 = vlaneseq
  %v165 = vshrl.u32 %v164, 7
  %v166 = vsub.s32 0, %v165
  %v167 = vrot.slane %v162, %v166
  %v169 = vadd.f32 %v160, %v167
  %v170 = vadd.f32 %v161, %v167
  %171 = vst.msk [vmem:[%s6] sm:$0xff] %vm40, %v169
  %172 = vst.msk [vmem:[%s6 + $0x8] sm:$0xff] %vm40, %v170
  // Predicated region
  $region26: #{decoder_layer.10} parent=0 // pred_check
    _
  $region27: #{decoder_layer.10} parent=0 // pred_check_branch
    %174 = sbr.rel (0) target = $region29
  $region28: #{decoder_layer.10} parent=0 // pred_region
    _
  $region29: #{decoder_layer.10} parent=0 // pred_fallthru
    _
  // Predicated region
  $region30: #{decoder_layer.10} parent=0 // pred_check
    _
  $region31: #{decoder_layer.10} parent=0 // pred_check_branch
    %176 = sbr.rel (0) target = $region33
  $region32: #{decoder_layer.10} parent=0 // pred_region
    _
  $region33: #{decoder_layer.10} parent=0 // pred_fallthru
    _

// kernel: decoder_layer.11
$region0: #{decoder_layer.11}
  #allocation0 [shape = 'u32[]', space=smem, size = 0x4, offset = 0x4, fixed_abs, tag = 'smem constant byte address 0x4 - core index']
  #allocation1 [shape = 'u32[144,128]{1,0:T(1,128)}', space=vmem, size = 0x12000, scoped, tag = 'internal scratch']
  %s0 = inlined_call_operand.vmem [shape: f32[16,64], index: 0, kind: input, shape index: {}]
  %s1 = inlined_call_operand.vmem [shape: f32[64,64], index: 1, kind: input, shape index: {}]
  %s2 = inlined_call_operand.vmem [shape: f32[1,64], index: 2, kind: input, shape index: {}]
  %s3 = inlined_call_operand.vmem [shape: f32[16,64], index: 3, kind: output, shape index: {}]
  %s4 = sld [smem:[#allocation0]]
  $region22: #{decoder_layer.11} parent=0
    _
  %s6 = ssub.s32 1, %s4
  %s7 = scalar_select 0, %s6, %s4
  // Predicated region
  $region2: #{decoder_layer.11} parent=0 // pred_check
    _
  $region3: #{decoder_layer.11} parent=0 // pred_check_branch
    %9 = sbr.rel (0) target = $region5
  $region4: #{decoder_layer.11} parent=0 // pred_region
    _
  $region5: #{decoder_layer.11} parent=0 // pred_fallthru
    _
  // Predicated region
  $region6: #{decoder_layer.11} parent=0 // pred_check
    _
  $region7: #{decoder_layer.11} parent=0 // pred_check_branch
    %11 = sbr.rel (0) target = $region9
  $region8: #{decoder_layer.11} parent=0 // pred_region
    _
  $region9: #{decoder_layer.11} parent=0 // pred_fallthru
    _
  // Predicated region
  $region10: #{decoder_layer.11} parent=0 // pred_check
    _
  $region11: #{decoder_layer.11} parent=0 // pred_check_branch
    %13 = sbr.rel (0) target = $region13
  $region12: #{decoder_layer.11} parent=0 // pred_region
    _
  $region13: #{decoder_layer.11} parent=0 // pred_fallthru
    _
  %v14 = vld [vmem:[%s0] sm:$0xff]
  %v15 = vld [vmem:[%s0 + $0x8] sm:$0xff]
  %v16 = vld [vmem:[%s1] sm:$0xff]
  %v17 = vld [vmem:[%s1 + $0x8] sm:$0xff]
  %v18 = vld [vmem:[%s1 + $0x10] sm:$0xff]
  %v19 = vld [vmem:[%s1 + $0x18] sm:$0xff]
  %v20 = vld [vmem:[%s1 + $0x20] sm:$0xff]
  %v21 = vld [vmem:[%s1 + $0x28] sm:$0xff]
  %v22 = vld [vmem:[%s1 + $0x30] sm:$0xff]
  %v23 = vld [vmem:[%s1 + $0x38] sm:$0xff]
  %v24 = vld [vmem:[%s2] sm:$0x1]
  %v26 = vlaneseq
  %v27 = vshrl.u32 %v26, 7
  %v28 = vsub.s32 0, %v27
  %v29 = vrot.slane %v24, %v28
  %vm31 = vcmask 523264
  %v33 = vsel %vm31, %v14, 0
  %v36 = vsel %vm31, %v15, 0
  %38 = vmatprep.subr.mxu0 0.0
  %39 = vmatpush1.msra.mxu0 0.0
  %40 = vmatprep.subr.mxu0 0.0
  %41 = vmatpush1.msra.mxu0 0.0
  %42 = vmatprep.subr.mxu0 0.0
  %43 = vmatpush1.msra.mxu0 0.0
  %44 = vmatprep.subr.mxu0 0.0
  %45 = vmatpush1.msra.mxu0 0.0
  %46 = vmatprep.subr.mxu0 0.0
  %47 = vmatpush1.msra.mxu0 0.0
  %48 = vmatprep.subr.mxu0 0.0
  %49 = vmatpush1.msra.mxu0 0.0
  %50 = vmatprep.subr.mxu0 0.0
  %51 = vmatpush1.msra.mxu0 0.0
  %52 = vmatprep.subr.mxu0 0.0
  %53 = vmatpush1.msra.mxu0 0.0
  %54 = vmatprep.subr.mxu0 0.0
  %55 = vmatpush1.msra.mxu0 %v23
  %56 = vmatprep.subr.mxu0 0.0
  %57 = vmatpush1.msra.mxu0 %v22
  %58 = vmatprep.subr.mxu0 0.0
  %59 = vmatpush1.msra.mxu0 %v21
  %60 = vmatprep.subr.mxu0 0.0
  %61 = vmatpush1.msra.mxu0 %v20
  %62 = vmatprep.subr.mxu0 0.0
  %63 = vmatpush1.msra.mxu0 %v19
  %64 = vmatprep.subr.mxu0 0.0
  %65 = vmatpush1.msra.mxu0 %v18
  %66 = vmatprep.subr.mxu0 0.0
  %67 = vmatpush1.msra.mxu0 %v17
  %68 = vmatprep.subr.mxu0 0.0
  %69 = vmatpush1.msra.mxu0 %v16
  %70 = vmatprep.subr.mxu0 0.0
  %71 = vmatpush2.msra.mxu0 0.0
  %72 = vmatprep.subr.mxu0 0.0
  %73 = vmatpush2.msra.mxu0 0.0
  %74 = vmatprep.subr.mxu0 0.0
  %75 = vmatpush2.msra.mxu0 0.0
  %76 = vmatprep.subr.mxu0 0.0
  %77 = vmatpush2.msra.mxu0 0.0
  %78 = vmatprep.subr.mxu0 0.0
  %79 = vmatpush2.msra.mxu0 0.0
  %80 = vmatprep.subr.mxu0 0.0
  %81 = vmatpush2.msra.mxu0 0.0
  %82 = vmatprep.subr.mxu0 0.0
  %83 = vmatpush2.msra.mxu0 0.0
  %84 = vmatprep.subr.mxu0 0.0
  %85 = vmatpush2.msra.mxu0 0.0
  %86 = vmatprep.subr.mxu0 0.0
  %87 = vmatpush2.msra.mxu0 0.0
  %88 = vmatprep.subr.mxu0 0.0
  %89 = vmatpush2.msra.mxu0 0.0
  %90 = vmatprep.subr.mxu0 0.0
  %91 = vmatpush2.msra.mxu0 0.0
  %92 = vmatprep.subr.mxu0 0.0
  %93 = vmatpush2.msra.mxu0 0.0
  %94 = vmatprep.subr.mxu0 0.0
  %95 = vmatpush2.msra.mxu0 0.0
  %96 = vmatprep.subr.mxu0 0.0
  %97 = vmatpush2.msra.mxu0 0.0
  %98 = vmatprep.subr.mxu0 0.0
  %99 = vmatpush2.msra.mxu0 0.0
  %100 = vmatprep.subr.mxu0 0.0
  %101 = vmatpush2.msra.mxu0 0.0
  %102 = vmatprep.mubr.f32.mxu0 0.0
  %103 = vmatmul.mubr.f32.gmra.mxu0 %v33
  %v104 = vpop.f32.mrf.mxu0
  %v105 = vadd.f32 %v29, %v104
  %v106 = vpop.f32.mrf.mxu0
  %107 = vmatprep.mubr.f32.mxu0 0.0
  %108 = vmatmul.mubr.f32.gmra.mxu0 %v36
  %v109 = vpop.f32.mrf.mxu0
  %v110 = vadd.f32 %v29, %v109
  %v111 = vpop.f32.mrf.mxu0
  %112 = vdwg.mxu0
  %113 = vst.msk [vmem:[%s3] sm:$0xff] %vm31, %v105
  %114 = vst.msk [vmem:[%s3 + $0x8] sm:$0xff] %vm31, %v110
  // Predicated region
  $region14: #{decoder_layer.11} parent=0 // pred_check
    _
  $region15: #{decoder_layer.11} parent=0 // pred_check_branch
    %116 = sbr.rel (0) target = $region17
  $region16: #{decoder_layer.11} parent=0 // pred_region
    _
  $region17: #{decoder_layer.11} parent=0 // pred_fallthru
    _
  // Predicated region
  $region18: #{decoder_layer.11} parent=0 // pred_check
    _
  $region19: #{decoder_layer.11} parent=0 // pred_check_branch
    %118 = sbr.rel (0) target = $region21
  $region20: #{decoder_layer.11} parent=0 // pred_region
    _
  $region21: #{decoder_layer.11} parent=0 // pred_fallthru
    _

// kernel: decoder_layer.15
$region0: #{decoder_layer.15}
  #allocation0 [shape = 'u32[]', space=smem, size = 0x4, offset = 0x4, fixed_abs, tag = 'smem constant byte address 0x4 - core index']
  #allocation1 [shape = 'u32[144,128]{1,0:T(1,128)}', space=vmem, size = 0x12000, scoped, tag = 'internal scratch']
  #allocation2 [shape = 'f32[16,64]{1,0:T(8,128)}', space=vmem, size = 0x2000, scoped, tag = 'scratch operand']
  %s0 = inlined_call_operand.vmem [shape: f32[16,64], index: 0, kind: input, shape index: {}]
  %s1 = inlined_call_operand.vmem [shape: f32[64,128], index: 1, kind: input, shape index: {}]
  %s2 = inlined_call_operand.vmem [shape: f32[1,128], index: 2, kind: input, shape index: {}]
  %s3 = inlined_call_operand.vmem [shape: f32[128,64], index: 3, kind: input, shape index: {}]
  %s4 = inlined_call_operand.vmem [shape: f32[1,64], index: 4, kind: input, shape index: {}]
  %s5 = inlined_call_operand.vmem [shape: f32[1,64], index: 5, kind: input, shape index: {}]
  %s6 = inlined_call_operand.vmem [shape: f32[1,64], index: 6, kind: input, shape index: {}]
  %s7 = inlined_call_operand.hbm [shape: f32[16,64], index: 7, kind: output, shape index: {}]
  %s8 = sld [smem:[#allocation0]]
  $region46: #{decoder_layer.15} parent=0
    _
  %s10 = ssub.s32 1, %s8
  %s11 = scalar_select 0, %s10, %s8
  $region1: #{decoder_layer.15} parent=0
    #allocation3 [shape = 'u8[8192]{0}', space=vmem, size = 0x2000, scoped, tag = 'output window, operand 0, single buffered']
    #allocation4 [shape = 's32[1]{0}', space=sflag, size = 0x4, scoped, tag = 'scoped memory for decoder_layer.15']
    %12 = vsyncpa [#allocation4], 0
    // Predicated region
    $region2: #{decoder_layer.15} parent=1 // pred_check
      _
    $region3: #{decoder_layer.15} parent=1 // pred_check_branch
      %14 = sbr.rel (0) target = $region5
    $region4: #{decoder_layer.15} parent=1 // pred_region
      _
    $region5: #{decoder_layer.15} parent=1 // pred_fallthru
      _
    // Predicated region
    $region6: #{decoder_layer.15} parent=1 // pred_check
      _
    $region7: #{decoder_layer.15} parent=1 // pred_check_branch
      %16 = sbr.rel (0) target = $region9
    $region8: #{decoder_layer.15} parent=1 // pred_region
      _
    $region9: #{decoder_layer.15} parent=1 // pred_fallthru
      _
    // Predicated region
    $region10: #{decoder_layer.15} parent=1 // pred_check
      _
    $region11: #{decoder_layer.15} parent=1 // pred_check_branch
      %18 = sbr.rel (0) target = $region13
    $region12: #{decoder_layer.15} parent=1 // pred_region
      _
    $region13: #{decoder_layer.15} parent=1 // pred_fallthru
      _
    // Predicated region
    $region14: #{decoder_layer.15} parent=1 // pred_check
      _
    $region15: #{decoder_layer.15} parent=1 // pred_check_branch
      %20 = sbr.rel (0) target = $region17
    $region16: #{decoder_layer.15} parent=1 // pred_region
      _
    $region17: #{decoder_layer.15} parent=1 // pred_fallthru
      _
    // Predicated region
    $region18: #{decoder_layer.15} parent=1 // pred_check
      _
    $region19: #{decoder_layer.15} parent=1 // pred_check_branch
      %22 = sbr.rel (0) target = $region21
    $region20: #{decoder_layer.15} parent=1 // pred_region
      _
    $region21: #{decoder_layer.15} parent=1 // pred_fallthru
      _
    // Predicated region
    $region22: #{decoder_layer.15} parent=1 // pred_check
      _
    $region23: #{decoder_layer.15} parent=1 // pred_check_branch
      %24 = sbr.rel (0) target = $region25
    $region24: #{decoder_layer.15} parent=1 // pred_region
      _
    $region25: #{decoder_layer.15} parent=1 // pred_fallthru
      _
    // Predicated region
    $region26: #{decoder_layer.15} parent=1 // pred_check
      _
    $region27: #{decoder_layer.15} parent=1 // pred_check_branch
      %26 = sbr.rel (0) target = $region29
    $region28: #{decoder_layer.15} parent=1 // pred_region
      _
    $region29: #{decoder_layer.15} parent=1 // pred_fallthru
      _
    %p27 = scmp.eq.s32.totalorder 0, 0
    // Predicated region
    $region30: #{decoder_layer.15} parent=1 // pred_check
      %p28 = pneg %p27
    $region31: #{decoder_layer.15} parent=1 // pred_check_branch
      %30 = sbr.rel (%p28) target = $region33
    $region32: #{decoder_layer.15} parent=1 // pred_region
      %vm31 = vcmask 523264
      %32 = vst.msk [vmem:[#allocation2] sm:$0xff] %vm31, 0.0
      %33 = vst.msk [vmem:[#allocation2 + $0x8] sm:$0xff] %vm31, 0.0
    $region33: #{decoder_layer.15} parent=1 // pred_fallthru
      _
    %v34 = vld [vmem:[%s0] sm:$0xff]
    %v35 = vld [vmem:[%s0 + $0x8] sm:$0xff]
    %v36 = vld [vmem:[%s1] sm:$0xff]
    %v37 = vld [vmem:[%s1 + $0x8] sm:$0xff]
    %v38 = vld [vmem:[%s1 + $0x10] sm:$0xff]
    %v39 = vld [vmem:[%s1 + $0x18] sm:$0xff]
    %v40 = vld [vmem:[%s1 + $0x20] sm:$0xff]
    %v41 = vld [vmem:[%s1 + $0x28] sm:$0xff]
    %v42 = vld [vmem:[%s1 + $0x30] sm:$0xff]
    %v43 = vld [vmem:[%s1 + $0x38] sm:$0xff]
    %v44 = vld [vmem:[%s2] sm:$0x1]
    %v46 = vlaneseq
    %v47 = vshrl.u32 %v46, 7
    %v48 = vsub.s32 0, %v47
    %v49 = vrot.slane %v44, %v48
    %vm51 = vcmask 523264
    %v53 = vsel %vm51, %v34, 0
    %v56 = vsel %vm51, %v35, 0
    %58 = vmatprep.subr.mxu0 0.0
    %59 = vmatpush1.msra.mxu0 0.0
    %60 = vmatprep.subr.mxu0 0.0
    %61 = vmatpush1.msra.mxu0 0.0
    %62 = vmatprep.subr.mxu0 0.0
    %63 = vmatpush1.msra.mxu0 0.0
    %64 = vmatprep.subr.mxu0 0.0
    %65 = vmatpush1.msra.mxu0 0.0
    %66 = vmatprep.subr.mxu0 0.0
    %67 = vmatpush1.msra.mxu0 0.0
    %68 = vmatprep.subr.mxu0 0.0
    %69 = vmatpush1.msra.mxu0 0.0
    %70 = vmatprep.subr.mxu0 0.0
    %71 = vmatpush1.msra.mxu0 0.0
    %72 = vmatprep.subr.mxu0 0.0
    %73 = vmatpush1.msra.mxu0 0.0
    %74 = vmatprep.subr.mxu0 0.0
    %75 = vmatpush1.msra.mxu0 %v43
    %76 = vmatprep.subr.mxu0 0.0
    %77 = vmatpush1.msra.mxu0 %v42
    %78 = vmatprep.subr.mxu0 0.0
    %79 = vmatpush1.msra.mxu0 %v41
    %80 = vmatprep.subr.mxu0 0.0
    %81 = vmatpush1.msra.mxu0 %v40
    %82 = vmatprep.subr.mxu0 0.0
    %83 = vmatpush1.msra.mxu0 %v39
    %84 = vmatprep.subr.mxu0 0.0
    %85 = vmatpush1.msra.mxu0 %v38
    %86 = vmatprep.subr.mxu0 0.0
    %87 = vmatpush1.msra.mxu0 %v37
    %88 = vmatprep.subr.mxu0 0.0
    %89 = vmatpush1.msra.mxu0 %v36
    %90 = vmatprep.subr.mxu0 0.0
    %91 = vmatpush2.msra.mxu0 0.0
    %92 = vmatprep.subr.mxu0 0.0
    %93 = vmatpush2.msra.mxu0 0.0
    %94 = vmatprep.subr.mxu0 0.0
    %95 = vmatpush2.msra.mxu0 0.0
    %96 = vmatprep.subr.mxu0 0.0
    %97 = vmatpush2.msra.mxu0 0.0
    %98 = vmatprep.subr.mxu0 0.0
    %99 = vmatpush2.msra.mxu0 0.0
    %100 = vmatprep.subr.mxu0 0.0
    %101 = vmatpush2.msra.mxu0 0.0
    %102 = vmatprep.subr.mxu0 0.0
    %103 = vmatpush2.msra.mxu0 0.0
    %104 = vmatprep.subr.mxu0 0.0
    %105 = vmatpush2.msra.mxu0 0.0
    %106 = vmatprep.subr.mxu0 0.0
    %107 = vmatpush2.msra.mxu0 0.0
    %108 = vmatprep.subr.mxu0 0.0
    %109 = vmatpush2.msra.mxu0 0.0
    %110 = vmatprep.subr.mxu0 0.0
    %111 = vmatpush2.msra.mxu0 0.0
    %112 = vmatprep.subr.mxu0 0.0
    %113 = vmatpush2.msra.mxu0 0.0
    %114 = vmatprep.subr.mxu0 0.0
    %115 = vmatpush2.msra.mxu0 0.0
    %116 = vmatprep.subr.mxu0 0.0
    %117 = vmatpush2.msra.mxu0 0.0
    %118 = vmatprep.subr.mxu0 0.0
    %119 = vmatpush2.msra.mxu0 0.0
    %120 = vmatprep.subr.mxu0 0.0
    %121 = vmatpush2.msra.mxu0 0.0
    %122 = vmatprep.mubr.f32.mxu0 0.0
    %123 = vmatmul.mubr.f32.gmra.mxu0 %v53
    %v124 = vpop.f32.mrf.mxu0
    %v125 = vadd.f32 %v49, %v124
    %v126 = vpop.f32.mrf.mxu0
    %127 = vmatprep.mubr.f32.mxu0 0.0
    %128 = vmatmul.mubr.f32.gmra.mxu0 %v56
    %v129 = vpop.f32.mrf.mxu0
    %v130 = vadd.f32 %v49, %v129
    %v131 = vpop.f32.mrf.mxu0
    %132 = vdwg.mxu0
    %v133 = vmax.f32 %v125, 0.0
    %v134 = vmax.f32 %v130, 0.0
    %v135 = vld [vmem:[#allocation2] sm:$0xff]
    %v136 = vld [vmem:[#allocation2 + $0x8] sm:$0xff]
    %v137 = vld [vmem:[%s3] sm:$0xff]
    %v138 = vld [vmem:[%s3 + $0x8] sm:$0xff]
    %v139 = vld [vmem:[%s3 + $0x10] sm:$0xff]
    %v140 = vld [vmem:[%s3 + $0x18] sm:$0xff]
    %v141 = vld [vmem:[%s3 + $0x20] sm:$0xff]
    %v142 = vld [vmem:[%s3 + $0x28] sm:$0xff]
    %v143 = vld [vmem:[%s3 + $0x30] sm:$0xff]
    %v144 = vld [vmem:[%s3 + $0x38] sm:$0xff]
    %v145 = vld [vmem:[%s3 + $0x40] sm:$0xff]
    %v146 = vld [vmem:[%s3 + $0x48] sm:$0xff]
    %v147 = vld [vmem:[%s3 + $0x50] sm:$0xff]
    %v148 = vld [vmem:[%s3 + $0x58] sm:$0xff]
    %v149 = vld [vmem:[%s3 + $0x60] sm:$0xff]
    %v150 = vld [vmem:[%s3 + $0x68] sm:$0xff]
    %v151 = vld [vmem:[%s3 + $0x70] sm:$0xff]
    %v152 = vld [vmem:[%s3 + $0x78] sm:$0xff]
    %153 = vmatprep.subr.mxu0 0.0
    %154 = vmatpush1.msra.mxu0 %v152
    %155 = vmatprep.subr.mxu0 0.0
    %156 = vmatpush1.msra.mxu0 %v151
    %157 = vmatprep.subr.mxu0 0.0
    %158 = vmatpush1.msra.mxu0 %v150
    %159 = vmatprep.subr.mxu0 0.0
    %160 = vmatpush1.msra.mxu0 %v149
    %161 = vmatprep.subr.mxu0 0.0
    %162 = vmatpush1.msra.mxu0 %v148
    %163 = vmatprep.subr.mxu0 0.0
    %164 = vmatpush1.msra.mxu0 %v147
    %165 = vmatprep.subr.mxu0 0.0
    %166 = vmatpush1.msra.mxu0 %v146
    %167 = vmatprep.subr.mxu0 0.0
    %168 = vmatpush1.msra.mxu0 %v145
    %169 = vmatprep.subr.mxu0 0.0
    %170 = vmatpush1.msra.mxu0 %v144
    %171 = vmatprep.subr.mxu0 0.0
    %172 = vmatpush1.msra.mxu0 %v143
    %173 = vmatprep.subr.mxu0 0.0
    %174 = vmatpush1.msra.mxu0 %v142
    %175 = vmatprep.subr.mxu0 0.0
    %176 = vmatpush1.msra.mxu0 %v141
    %177 = vmatprep.subr.mxu0 0.0
    %178 = vmatpush1.msra.mxu0 %v140
    %179 = vmatprep.subr.mxu0 0.0
    %180 = vmatpush1.msra.mxu0 %v139
    %181 = vmatprep.subr.mxu0 0.0
    %182 = vmatpush1.msra.mxu0 %v138
    %183 = vmatprep.subr.mxu0 0.0
    %184 = vmatpush1.msra.mxu0 %v137
    %185 = vmatprep.subr.mxu0 0.0
    %186 = vmatpush2.msra.mxu0 0.0
    %187 = vmatprep.subr.mxu0 0.0
    %188 = vmatpush2.msra.mxu0 0.0
    %189 = vmatprep.subr.mxu0 0.0
    %190 = vmatpush2.msra.mxu0 0.0
    %191 = vmatprep.subr.mxu0 0.0
    %192 = vmatpush2.msra.mxu0 0.0
    %193 = vmatprep.subr.mxu0 0.0
    %194 = vmatpush2.msra.mxu0 0.0
    %195 = vmatprep.subr.mxu0 0.0
    %196 = vmatpush2.msra.mxu0 0.0
    %197 = vmatprep.subr.mxu0 0.0
    %198 = vmatpush2.msra.mxu0 0.0
    %199 = vmatprep.subr.mxu0 0.0
    %200 = vmatpush2.msra.mxu0 0.0
    %201 = vmatprep.subr.mxu0 0.0
    %202 = vmatpush2.msra.mxu0 0.0
    %203 = vmatprep.subr.mxu0 0.0
    %204 = vmatpush2.msra.mxu0 0.0
    %205 = vmatprep.subr.mxu0 0.0
    %206 = vmatpush2.msra.mxu0 0.0
    %207 = vmatprep.subr.mxu0 0.0
    %208 = vmatpush2.msra.mxu0 0.0
    %209 = vmatprep.subr.mxu0 0.0
    %210 = vmatpush2.msra.mxu0 0.0
    %211 = vmatprep.subr.mxu0 0.0
    %212 = vmatpush2.msra.mxu0 0.0
    %213 = vmatprep.subr.mxu0 0.0
    %214 = vmatpush2.msra.mxu0 0.0
    %215 = vmatprep.subr.mxu0 0.0
    %216 = vmatpush2.msra.mxu0 0.0
    %217 = vmatprep.mubr.f32.mxu0 0.0
    %218 = vmatmul.mubr.f32.gmra.mxu0 %v133
    %v219 = vpop.f32.mrf.mxu0
    %v220 = vadd.f32 0.0, %v219
    %v221 = vpop.f32.mrf.mxu0
    %222 = vmatprep.mubr.f32.mxu0 0.0
    %223 = vmatmul.mubr.f32.gmra.mxu0 %v134
    %v224 = vpop.f32.mrf.mxu0
    %v225 = vadd.f32 0.0, %v224
    %v226 = vpop.f32.mrf.mxu0
    %227 = vdwg.mxu0
    %v228 = vadd.f32 %v135, %v220
    %v229 = vadd.f32 %v136, %v225
    %230 = vst.msk [vmem:[#allocation2] sm:$0xff] %vm51, %v228
    %231 = vst.msk [vmem:[#allocation2 + $0x8] sm:$0xff] %vm51, %v229
    // Predicated region
    $region34: #{decoder_layer.15} parent=1 // pred_check
      %p232 = pneg %p27
    $region35: #{decoder_layer.15} parent=1 // pred_check_branch
      %234 = sbr.rel (%p232) target = $region37
    $region36: #{decoder_layer.15} parent=1 // pred_region
      %v235 = vld [vmem:[#allocation2] sm:$0xff]
      %v236 = vld [vmem:[#allocation2 + $0x8] sm:$0xff]
      %v237 = vld [vmem:[%s4] sm:$0x1]
      %v239 = vlaneseq
      %v240 = vshrl.u32 %v239, 7
      %v241 = vsub.s32 0, %v240
      %v242 = vrot.slane %v237, %v241
      %v244 = vadd.f32 %v235, %v242
      %v245 = vadd.f32 %v236, %v242
      %v246 = vadd.f32 %v244, %v34
      %v247 = vadd.f32 %v245, %v35
      %v248 = vsel %vm51, %v246, 0.0
      %249 = vadd.xlane.f32.xlu0 %v248
      %v250 = vpop.xlane.xlu0 %249
      %v251 = vsel %vm51, %v247, 0.0
      %252 = vadd.xlane.f32.xlu0 %v251
      %v253 = vpop.xlane.xlu0 %252
      %v254 = vrcp.pop 64.0
      %v255 = vmul.f32 %v250, %v254
      %v256 = vmul.f32 %v253, %v254
      %v257 = vsub.f32 %v246, %v255
      %v258 = vsub.f32 %v247, %v256
      %v259 = vmul.f32 %v257, %v257
      %v260 = vmul.f32 %v258, %v258
      %v261 = vsel %vm51, %v259, 0.0
      %262 = vadd.xlane.f32.xlu0 %v261
      %v263 = vpop.xlane.xlu0 %262
      %v264 = vsel %vm51, %v260, 0.0
      %265 = vadd.xlane.f32.xlu0 %v264
      %v266 = vpop.xlane.xlu0 %265
      %v267 = vmul.f32 %v263, %v254
      %v268 = vmul.f32 %v266, %v254
      %v269 = vadd.f32 %v267, 1e-05
      %v270 = vadd.f32 %v268, 1e-05
      %v271 = vrsqrt.pop %v269
      %v272 = vrsqrt.pop %v270
      %v273 = vmul.f32 %v257, %v271
      %v274 = vmul.f32 %v258, %v272
      %v275 = vld [vmem:[%s5] sm:$0x1]
      %v277 = vlaneseq
      %v278 = vshrl.u32 %v277, 7
      %v279 = vsub.s32 0, %v278
      %v280 = vrot.slane %v275, %v279
      %v282 = vmul.f32 %v273, %v280
      %v283 = vmul.f32 %v274, %v280
      %v284 = vld [vmem:[%s6] sm:$0x1]
      %v286 = vlaneseq
      %v287 = vshrl.u32 %v286, 7
      %v288 = vsub.s32 0, %v287
      %v289 = vrot.slane %v284, %v288
      %v291 = vadd.f32 %v282, %v289
      %v292 = vadd.f32 %v283, %v289
      %293 = vst.msk [vmem:[#allocation3] sm:$0xff] %vm51, %v291
      %294 = vst.msk [vmem:[#allocation3 + $0x8] sm:$0xff] %vm51, %v292
    $region37: #{decoder_layer.15} parent=1 // pred_fallthru
      _
    // Predicated region
    $region38: #{decoder_layer.15} parent=1 // pred_check
      _
    $region39: #{decoder_layer.15} parent=1 // pred_check_branch
      %296 = sbr.rel (0) target = $region41
    $region40: #{decoder_layer.15} parent=1 // pred_region
      %s298 = ssub.s32 256, 256
      %299 = vsyncadd [#allocation4], %s298
      %s300 = sshll.u32 [#allocation3], 4
      %s301 = int_to_ptr.vmem [resolvable:$true] %s300
      %306 = dma.vmem_to_hbm [thread:$0]  %s301, 256, %s7, [#allocation4], 128, 128, 8
    $region41: #{decoder_layer.15} parent=1 // pred_fallthru
      _
    // Predicated region
    $region42: #{decoder_layer.15} parent=1 // pred_check
      _
    $region43: #{decoder_layer.15} parent=1 // pred_check_branch
      %308 = sbr.rel (0) target = $region45
    $region44: #{decoder_layer.15} parent=1 // pred_region
      %309 = dma.done [#allocation4], 256
    $region45: #{decoder_layer.15} parent=1 // pred_fallthru
      _
    %310 = vsyncpa [#allocation4], 1

</llo_original>
